<compile_context>
chip_gen: v6e
topology: v6e:2x2x1
jax: 0.10.0
libtpu: 0.0.40
codegen_flags: <defaults>
</compile_context>

<pallas_src>
import functools

import jax
import jax.numpy as jnp
from jax.experimental import pallas as pl
from jax.experimental.pallas import tpu as pltpu


def _round_up(x, m):
    return (x + m - 1) // m * m


# ----------------------------------------------------------------------------
# Fused DownBlock kernel (one batch element per grid step)
# ----------------------------------------------------------------------------
def _downblock_kernel(x_ref, w1_ref, b1_ref, w2_ref, b2_ref, o_ref, mid_ref,
                      *, H, W, Ho, Wo, pad, wl, cmid):
    """conv1(1x1)+BN+ReLU -> conv2(3x3, s2, pad)+BN+ReLU, fully in VMEM.

    x_ref  : (1, H*W, Cin)             bf16  NHWC pixels, flattened spatially
    w1_ref : (Cin, Cmid)               bf16  conv1 weight, BN scale folded in
    b1_ref : (1, Cmid)                 f32   conv1 folded BN bias
    w2_ref : (9, Cmid, Cout_p)         bf16  conv2 weight per 3x3 tap, scale folded
    b2_ref : (1, Cout_p)               f32   conv2 folded BN bias (zero padded)
    o_ref  : (1, Ho*Wo, Cout_p)        f32   output (lane-dense, padded N)
    mid_ref: (H+2*pad, wl+W+pad, Cmid) f32   VMEM scratch: zero-padded conv1 output
    """
    # ---- conv1: 1x1 conv == a single MXU matmul; bias + ReLU epilogue -------
    acc1 = jnp.dot(x_ref[0], w1_ref[...], preferred_element_type=jnp.float32)
    mid = jnp.maximum(acc1 + b1_ref[...], 0.0)                # (H*W, Cmid) f32

    # ---- stage into zero-padded VMEM scratch (no HBM round trip) ------------
    # `wl` is the left W-pad rounded up to 8 so this interior store is
    # sublane-aligned; the extra border columns stay zero (= conv padding).
    mid_ref[...] = jnp.zeros(mid_ref.shape, mid_ref.dtype)
    mid_ref[pad:pad + H, wl:wl + W, :] = mid.reshape(H, W, cmid)

    # ---- conv2: 3x3 stride-2 conv = 9 strided-view matmuls, f32 accumulate --
    cout_p = o_ref.shape[-1]
    acc2 = jnp.zeros((Ho * Wo, cout_p), jnp.float32)
    for t in range(9):                                  # unrolled 3x3 taps
        i, j = divmod(t, 3)
        patch = mid_ref[pl.ds(i, Ho, stride=2),
                        pl.ds(wl - pad + j, Wo, stride=2), :]   # (Ho, Wo, Cmid)
        patch = patch.reshape(Ho * Wo, cmid).astype(jnp.bfloat16)
        acc2 = acc2 + jnp.dot(patch, w2_ref[t],
                              preferred_element_type=jnp.float32)

    o_ref[0] = jnp.maximum(acc2 + b2_ref[...], 0.0).astype(o_ref.dtype)


# ----------------------------------------------------------------------------
# Wrapper: layout plumbing + pallas_call
# ----------------------------------------------------------------------------
def down_block(x_nchw, w1f, b1, w2f, b2, *, padding=1):
    """DownBlock forward.  x_nchw: f32 (B, Cin, H, W) (PyTorch layout).

    w1f: (1,1,Cin,Cmid) bf16 (BN scale pre-folded), b1: (Cmid,) f32
    w2f: (3,3,Cmid,Cout) bf16 (BN scale pre-folded), b2: (Cout,) f32
    Returns f32 (B, Cout, Ho, Wo).
    """
    B, Cin, H, W = x_nchw.shape
    Cmid, Cout = w1f.shape[-1], w2f.shape[-1]
    stride = 2
    Ho = (H + 2 * padding - 3) // stride + 1
    Wo = (W + 2 * padding - 3) // stride + 1
    Cout_p = _round_up(Cout, 128)        # lane-dense output slab
    wl = _round_up(padding, 8)           # aligned left pad inside the scratch

    # NCHW -> NHWC -> (B, H*W, Cin); bf16 operands halve DMA bytes to the MXU.
    x = jnp.transpose(x_nchw, (0, 2, 3, 1)).reshape(B, H * W, Cin)
    x = x.astype(jnp.bfloat16)
    w1 = w1f.reshape(Cin, Cmid)
    w2 = jnp.pad(w2f, ((0, 0), (0, 0), (0, 0), (0, Cout_p - Cout)))
    w2 = w2.reshape(9, Cmid, Cout_p)
    b1r = b1.reshape(1, Cmid).astype(jnp.float32)
    b2r = jnp.pad(b2, (0, Cout_p - Cout)).reshape(1, Cout_p).astype(jnp.float32)

    kernel = functools.partial(_downblock_kernel, H=H, W=W, Ho=Ho, Wo=Wo,
                               pad=padding, wl=wl, cmid=Cmid)
    out = pl.pallas_call(
        kernel,
        out_shape=jax.ShapeDtypeStruct((B, Ho * Wo, Cout_p), jnp.float32),
        grid=(B,),
        in_specs=[
            pl.BlockSpec((1, H * W, Cin), lambda b: (b, 0, 0)),
            pl.BlockSpec((Cin, Cmid), lambda b: (0, 0)),
            pl.BlockSpec((1, Cmid), lambda b: (0, 0)),
            pl.BlockSpec((9, Cmid, Cout_p), lambda b: (0, 0, 0)),
            pl.BlockSpec((1, Cout_p), lambda b: (0, 0)),
        ],
        out_specs=pl.BlockSpec((1, Ho * Wo, Cout_p), lambda b: (b, 0, 0)),
        scratch_shapes=[
            pltpu.VMEM((H + 2 * padding, wl + W + padding, Cmid), jnp.float32),
        ],
        compiler_params=pltpu.CompilerParams(
            dimension_semantics=("parallel",)),
    )(x, w1, b1r, w2, b2r)

    out = out[..., :Cout].reshape(B, Ho, Wo, Cout)     # un-pad N, restore HW
    return jnp.transpose(out, (0, 3, 1, 2))            # back to NCHW


# ----------------------------------------------------------------------------
# Pure-XLA reference (same bf16-operand / f32-accumulate numerics)
# ----------------------------------------------------------------------------
def down_block_ref(x_nchw, w1f, b1, w2f, b2, *, padding=1):
    x = jnp.transpose(x_nchw, (0, 2, 3, 1)).astype(jnp.bfloat16)
    dn = ("NHWC", "HWIO", "NHWC")
    y = jax.lax.conv_general_dilated(x, w1f, (1, 1), "VALID",
                                     dimension_numbers=dn,
                                     preferred_element_type=jnp.float32)
    y = jnp.maximum(y + b1.reshape(1, 1, 1, -1), 0.0)
    z = jax.lax.conv_general_dilated(y.astype(jnp.bfloat16), w2f, (2, 2),
                                     ((padding, padding), (padding, padding)),
                                     dimension_numbers=dn,
                                     preferred_element_type=jnp.float32)
    z = jnp.maximum(z + b2.reshape(1, 1, 1, -1), 0.0)
    return jnp.transpose(z, (0, 3, 1, 2))


# ----------------------------------------------------------------------------
# Deterministic parameter construction: Conv + BatchNorm folded (eval mode)
# ----------------------------------------------------------------------------
def make_conv_bn(key, k, cin, cout):
    kw, kg, kb, km, kv = jax.random.split(key, 5)
    w = jax.random.normal(kw, (k, k, cin, cout), jnp.float32) / (k * k * cin) ** 0.5
    gamma = 1.0 + 0.1 * jax.random.normal(kg, (cout,), jnp.float32)
    beta = 0.1 * jax.random.normal(kb, (cout,), jnp.float32)
    mean = 0.1 * jax.random.normal(km, (cout,), jnp.float32)
    var = 1.0 + 0.1 * jnp.abs(jax.random.normal(kv, (cout,), jnp.float32))
    scale = gamma * jax.lax.rsqrt(var + 1e-5)
    w_folded = (w * scale).astype(jnp.bfloat16)     # fold BN scale into weights
    bias = (beta - mean * scale).astype(jnp.float32)
    return w_folded, bias


if __name__ == "__main__":
    key = jax.random.PRNGKey(0)
    k1, k2, kx = jax.random.split(key, 3)

    # DownBlock(in_channels=64, out_channels=64, padding=1, lite=False)
    IN_C, OUT_C, PAD = 64, 64, 1
    MID_C = OUT_C // 2
    w1f, b1 = make_conv_bn(k1, 1, IN_C, MID_C)      # conv1: 1x1 -> out//2
    w2f, b2 = make_conv_bn(k2, 3, MID_C, OUT_C)     # conv2: 3x3, stride 2

    # Input: NCHW (PyTorch convention), batch=2, channels=64, spatial 16x16
    x = jax.random.normal(kx, (2, IN_C, 16, 16), jnp.float32)

    fwd = jax.jit(functools.partial(down_block, padding=PAD))
    out = fwd(x, w1f, b1, w2f, b2)
    jax.block_until_ready(out)

    assert out.shape == (2, OUT_C, 8, 8), out.shape
    assert out.dtype == jnp.float32

    ref = down_block_ref(x, w1f, b1, w2f, b2, padding=PAD)
    err = float(jnp.max(jnp.abs(out - ref)))
    assert jnp.allclose(out, ref, atol=1e-2, rtol=1e-2), err
    print("KERNEL_OK")
</pallas_src>

<mosaic_0001>
module attributes {stable_mosaic.version = 11 : i64} {
  func.func @_downblock_kernel(%arg0: i32, %arg1: memref<1x256x64xbf16, #tpu.memory_space<vmem>>, %arg2: memref<64x32xbf16, #tpu.memory_space<vmem>>, %arg3: memref<1x32xf32, #tpu.memory_space<vmem>>, %arg4: memref<9x32x128xbf16, #tpu.memory_space<vmem>>, %arg5: memref<1x128xf32, #tpu.memory_space<vmem>>, %arg6: memref<1x64x128xf32, #tpu.memory_space<vmem>>, %arg7: memref<18x25x32xf32, #tpu.memory_space<vmem>>) attributes {dimension_semantics = [#tpu.dimension_semantics<parallel>], iteration_bounds = array<i64: 2>, scalar_prefetch = 0 : i64, scratch_operands = 1 : i64, tpu.core_type = #tpu.core_type<tc>, window_params = [{transform_indices = @transform_0, window_bounds = array<i64: 1, 256, 64>}, {pipeline_mode = #tpu.pipeline_mode<synchronous>, transform_indices = @transform_1, window_bounds = array<i64: 64, 32>}, {pipeline_mode = #tpu.pipeline_mode<synchronous>, transform_indices = @transform_2, window_bounds = array<i64: 1, 32>}, {pipeline_mode = #tpu.pipeline_mode<synchronous>, transform_indices = @transform_3, window_bounds = array<i64: 9, 32, 128>}, {pipeline_mode = #tpu.pipeline_mode<synchronous>, transform_indices = @transform_4, window_bounds = array<i64: 1, 128>}, {transform_indices = @transform_5, window_bounds = array<i64: 1, 64, 128>}]} {
    %c0 = arith.constant 0 : index
    %c0_0 = arith.constant 0 : index
    %c0_1 = arith.constant 0 : index
    %0 = vector.load %arg1[%c0, %c0_0, %c0_1] : memref<1x256x64xbf16, #tpu.memory_space<vmem>>, vector<1x256x64xbf16>
    %1 = vector.shape_cast %0 : vector<1x256x64xbf16> to vector<256x64xbf16>
    %c0_2 = arith.constant 0 : index
    %c0_3 = arith.constant 0 : index
    %2 = vector.load %arg2[%c0_2, %c0_3] : memref<64x32xbf16, #tpu.memory_space<vmem>>, vector<64x32xbf16>
    %cst = arith.constant dense<0.000000e+00> : vector<256x32xf32>
    %3 = tpu.matmul %1, %2, %cst {dimension_numbers = #tpu.dot_dimension_numbers<[1], [0], [0], [1], [0, 0, 1, 1], [], []>} : vector<256x64xbf16>, vector<64x32xbf16>, vector<256x32xf32> -> vector<256x32xf32>
    %c0_4 = arith.constant 0 : index
    %c0_5 = arith.constant 0 : index
    %4 = vector.load %arg3[%c0_4, %c0_5] : memref<1x32xf32, #tpu.memory_space<vmem>>, vector<1x32xf32>
    %5 = vector.broadcast %4 : vector<1x32xf32> to vector<256x32xf32>
    %6 = arith.addf %3, %5 : vector<256x32xf32>
    %cst_6 = arith.constant 0.000000e+00 : f32
    %7 = vector.broadcast %cst_6 : f32 to vector<256x32xf32>
    %8 = arith.maximumf %6, %7 : vector<256x32xf32>
    %cst_7 = arith.constant 0.000000e+00 : f32
    %9 = vector.broadcast %cst_7 : f32 to vector<18x25x32xf32>
    %c0_8 = arith.constant 0 : index
    %c0_9 = arith.constant 0 : index
    %c0_10 = arith.constant 0 : index
    %10 = vector.load %arg7[%c0_8, %c0_9, %c0_10] : memref<18x25x32xf32, #tpu.memory_space<vmem>>, vector<18x25x32xf32>
    tpu.vector_store %arg7[%c0_8, %c0_9, %c0_10], %9 {strides = array<i32>} : memref<18x25x32xf32, #tpu.memory_space<vmem>>, vector<18x25x32xf32>,
    %11 = vector.shape_cast %8 : vector<256x32xf32> to vector<16x16x32xf32>
    %c1 = arith.constant 1 : index
    %c8 = arith.constant 8 : index
    %c0_11 = arith.constant 0 : index
    %12 = vector.load %arg7[%c1, %c8, %c0_11] : memref<18x25x32xf32, #tpu.memory_space<vmem>>, vector<16x16x32xf32>
    tpu.vector_store %arg7[%c1, %c8, %c0_11], %11 {strides = array<i32>} : memref<18x25x32xf32, #tpu.memory_space<vmem>>, vector<16x16x32xf32>,
    %cst_12 = arith.constant 0.000000e+00 : f32
    %13 = vector.broadcast %cst_12 : f32 to vector<64x128xf32>
    %c0_13 = arith.constant 0 : index
    %c7 = arith.constant 7 : index
    %c0_14 = arith.constant 0 : index
    %14 = tpu.strided_load %arg7[%c0_13, %c7, %c0_14] {strides = array<i32: 2, 2, 1>} : memref<18x25x32xf32, #tpu.memory_space<vmem>>, vector<8x8x32xf32>
    %15 = vector.shape_cast %14 : vector<8x8x32xf32> to vector<64x32xf32>
    %16 = arith.truncf %15 : vector<64x32xf32> to vector<64x32xbf16>
    %c0_15 = arith.constant 0 : index
    %c0_16 = arith.constant 0 : index
    %c0_17 = arith.constant 0 : index
    %17 = vector.load %arg4[%c0_15, %c0_16, %c0_17] : memref<9x32x128xbf16, #tpu.memory_space<vmem>>, vector<1x32x128xbf16>
    %18 = vector.shape_cast %17 : vector<1x32x128xbf16> to vector<32x128xbf16>
    %cst_18 = arith.constant dense<0.000000e+00> : vector<64x128xf32>
    %19 = tpu.matmul %16, %18, %cst_18 {dimension_numbers = #tpu.dot_dimension_numbers<[1], [0], [0], [1], [0, 0, 1, 1], [], []>} : vector<64x32xbf16>, vector<32x128xbf16>, vector<64x128xf32> -> vector<64x128xf32>
    %20 = arith.addf %13, %19 : vector<64x128xf32>
    %c0_19 = arith.constant 0 : index
    %c8_20 = arith.constant 8 : index
    %c0_21 = arith.constant 0 : index
    %21 = tpu.strided_load %arg7[%c0_19, %c8_20, %c0_21] {strides = array<i32: 2, 2, 1>} : memref<18x25x32xf32, #tpu.memory_space<vmem>>, vector<8x8x32xf32>
    %22 = vector.shape_cast %21 : vector<8x8x32xf32> to vector<64x32xf32>
    %23 = arith.truncf %22 : vector<64x32xf32> to vector<64x32xbf16>
    %c1_22 = arith.constant 1 : index
    %c0_23 = arith.constant 0 : index
    %c0_24 = arith.constant 0 : index
    %24 = vector.load %arg4[%c1_22, %c0_23, %c0_24] : memref<9x32x128xbf16, #tpu.memory_space<vmem>>, vector<1x32x128xbf16>
    %25 = vector.shape_cast %24 : vector<1x32x128xbf16> to vector<32x128xbf16>
    %cst_25 = arith.constant dense<0.000000e+00> : vector<64x128xf32>
    %26 = tpu.matmul %23, %25, %cst_25 {dimension_numbers = #tpu.dot_dimension_numbers<[1], [0], [0], [1], [0, 0, 1, 1], [], []>} : vector<64x32xbf16>, vector<32x128xbf16>, vector<64x128xf32> -> vector<64x128xf32>
    %27 = arith.addf %20, %26 : vector<64x128xf32>
    %c0_26 = arith.constant 0 : index
    %c9 = arith.constant 9 : index
    %c0_27 = arith.constant 0 : index
    %28 = tpu.strided_load %arg7[%c0_26, %c9, %c0_27] {strides = array<i32: 2, 2, 1>} : memref<18x25x32xf32, #tpu.memory_space<vmem>>, vector<8x8x32xf32>
    %29 = vector.shape_cast %28 : vector<8x8x32xf32> to vector<64x32xf32>
    %30 = arith.truncf %29 : vector<64x32xf32> to vector<64x32xbf16>
    %c2 = arith.constant 2 : index
    %c0_28 = arith.constant 0 : index
    %c0_29 = arith.constant 0 : index
    %31 = vector.load %arg4[%c2, %c0_28, %c0_29] : memref<9x32x128xbf16, #tpu.memory_space<vmem>>, vector<1x32x128xbf16>
    %32 = vector.shape_cast %31 : vector<1x32x128xbf16> to vector<32x128xbf16>
    %cst_30 = arith.constant dense<0.000000e+00> : vector<64x128xf32>
    %33 = tpu.matmul %30, %32, %cst_30 {dimension_numbers = #tpu.dot_dimension_numbers<[1], [0], [0], [1], [0, 0, 1, 1], [], []>} : vector<64x32xbf16>, vector<32x128xbf16>, vector<64x128xf32> -> vector<64x128xf32>
    %34 = arith.addf %27, %33 : vector<64x128xf32>
    %c1_31 = arith.constant 1 : index
    %c7_32 = arith.constant 7 : index
    %c0_33 = arith.constant 0 : index
    %35 = tpu.strided_load %arg7[%c1_31, %c7_32, %c0_33] {strides = array<i32: 2, 2, 1>} : memref<18x25x32xf32, #tpu.memory_space<vmem>>, vector<8x8x32xf32>
    %36 = vector.shape_cast %35 : vector<8x8x32xf32> to vector<64x32xf32>
    %37 = arith.truncf %36 : vector<64x32xf32> to vector<64x32xbf16>
    %c3 = arith.constant 3 : index
    %c0_34 = arith.constant 0 : index
    %c0_35 = arith.constant 0 : index
    %38 = vector.load %arg4[%c3, %c0_34, %c0_35] : memref<9x32x128xbf16, #tpu.memory_space<vmem>>, vector<1x32x128xbf16>
    %39 = vector.shape_cast %38 : vector<1x32x128xbf16> to vector<32x128xbf16>
    %cst_36 = arith.constant dense<0.000000e+00> : vector<64x128xf32>
    %40 = tpu.matmul %37, %39, %cst_36 {dimension_numbers = #tpu.dot_dimension_numbers<[1], [0], [0], [1], [0, 0, 1, 1], [], []>} : vector<64x32xbf16>, vector<32x128xbf16>, vector<64x128xf32> -> vector<64x128xf32>
    %41 = arith.addf %34, %40 : vector<64x128xf32>
    %c1_37 = arith.constant 1 : index
    %c8_38 = arith.constant 8 : index
    %c0_39 = arith.constant 0 : index
    %42 = tpu.strided_load %arg7[%c1_37, %c8_38, %c0_39] {strides = array<i32: 2, 2, 1>} : memref<18x25x32xf32, #tpu.memory_space<vmem>>, vector<8x8x32xf32>
    %43 = vector.shape_cast %42 : vector<8x8x32xf32> to vector<64x32xf32>
    %44 = arith.truncf %43 : vector<64x32xf32> to vector<64x32xbf16>
    %c4 = arith.constant 4 : index
    %c0_40 = arith.constant 0 : index
    %c0_41 = arith.constant 0 : index
    %45 = vector.load %arg4[%c4, %c0_40, %c0_41] : memref<9x32x128xbf16, #tpu.memory_space<vmem>>, vector<1x32x128xbf16>
    %46 = vector.shape_cast %45 : vector<1x32x128xbf16> to vector<32x128xbf16>
    %cst_42 = arith.constant dense<0.000000e+00> : vector<64x128xf32>
    %47 = tpu.matmul %44, %46, %cst_42 {dimension_numbers = #tpu.dot_dimension_numbers<[1], [0], [0], [1], [0, 0, 1, 1], [], []>} : vector<64x32xbf16>, vector<32x128xbf16>, vector<64x128xf32> -> vector<64x128xf32>
    %48 = arith.addf %41, %47 : vector<64x128xf32>
    %c1_43 = arith.constant 1 : index
    %c9_44 = arith.constant 9 : index
    %c0_45 = arith.constant 0 : index
    %49 = tpu.strided_load %arg7[%c1_43, %c9_44, %c0_45] {strides = array<i32: 2, 2, 1>} : memref<18x25x32xf32, #tpu.memory_space<vmem>>, vector<8x8x32xf32>
    %50 = vector.shape_cast %49 : vector<8x8x32xf32> to vector<64x32xf32>
    %51 = arith.truncf %50 : vector<64x32xf32> to vector<64x32xbf16>
    %c5 = arith.constant 5 : index
    %c0_46 = arith.constant 0 : index
    %c0_47 = arith.constant 0 : index
    %52 = vector.load %arg4[%c5, %c0_46, %c0_47] : memref<9x32x128xbf16, #tpu.memory_space<vmem>>, vector<1x32x128xbf16>
    %53 = vector.shape_cast %52 : vector<1x32x128xbf16> to vector<32x128xbf16>
    %cst_48 = arith.constant dense<0.000000e+00> : vector<64x128xf32>
    %54 = tpu.matmul %51, %53, %cst_48 {dimension_numbers = #tpu.dot_dimension_numbers<[1], [0], [0], [1], [0, 0, 1, 1], [], []>} : vector<64x32xbf16>, vector<32x128xbf16>, vector<64x128xf32> -> vector<64x128xf32>
    %55 = arith.addf %48, %54 : vector<64x128xf32>
    %c2_49 = arith.constant 2 : index
    %c7_50 = arith.constant 7 : index
    %c0_51 = arith.constant 0 : index
    %56 = tpu.strided_load %arg7[%c2_49, %c7_50, %c0_51] {strides = array<i32: 2, 2, 1>} : memref<18x25x32xf32, #tpu.memory_space<vmem>>, vector<8x8x32xf32>
    %57 = vector.shape_cast %56 : vector<8x8x32xf32> to vector<64x32xf32>
    %58 = arith.truncf %57 : vector<64x32xf32> to vector<64x32xbf16>
    %c6 = arith.constant 6 : index
    %c0_52 = arith.constant 0 : index
    %c0_53 = arith.constant 0 : index
    %59 = vector.load %arg4[%c6, %c0_52, %c0_53] : memref<9x32x128xbf16, #tpu.memory_space<vmem>>, vector<1x32x128xbf16>
    %60 = vector.shape_cast %59 : vector<1x32x128xbf16> to vector<32x128xbf16>
    %cst_54 = arith.constant dense<0.000000e+00> : vector<64x128xf32>
    %61 = tpu.matmul %58, %60, %cst_54 {dimension_numbers = #tpu.dot_dimension_numbers<[1], [0], [0], [1], [0, 0, 1, 1], [], []>} : vector<64x32xbf16>, vector<32x128xbf16>, vector<64x128xf32> -> vector<64x128xf32>
    %62 = arith.addf %55, %61 : vector<64x128xf32>
    %c2_55 = arith.constant 2 : index
    %c8_56 = arith.constant 8 : index
    %c0_57 = arith.constant 0 : index
    %63 = tpu.strided_load %arg7[%c2_55, %c8_56, %c0_57] {strides = array<i32: 2, 2, 1>} : memref<18x25x32xf32, #tpu.memory_space<vmem>>, vector<8x8x32xf32>
    %64 = vector.shape_cast %63 : vector<8x8x32xf32> to vector<64x32xf32>
    %65 = arith.truncf %64 : vector<64x32xf32> to vector<64x32xbf16>
    %c7_58 = arith.constant 7 : index
    %c0_59 = arith.constant 0 : index
    %c0_60 = arith.constant 0 : index
    %66 = vector.load %arg4[%c7_58, %c0_59, %c0_60] : memref<9x32x128xbf16, #tpu.memory_space<vmem>>, vector<1x32x128xbf16>
    %67 = vector.shape_cast %66 : vector<1x32x128xbf16> to vector<32x128xbf16>
    %cst_61 = arith.constant dense<0.000000e+00> : vector<64x128xf32>
    %68 = tpu.matmul %65, %67, %cst_61 {dimension_numbers = #tpu.dot_dimension_numbers<[1], [0], [0], [1], [0, 0, 1, 1], [], []>} : vector<64x32xbf16>, vector<32x128xbf16>, vector<64x128xf32> -> vector<64x128xf32>
    %69 = arith.addf %62, %68 : vector<64x128xf32>
    %c2_62 = arith.constant 2 : index
    %c9_63 = arith.constant 9 : index
    %c0_64 = arith.constant 0 : index
    %70 = tpu.strided_load %arg7[%c2_62, %c9_63, %c0_64] {strides = array<i32: 2, 2, 1>} : memref<18x25x32xf32, #tpu.memory_space<vmem>>, vector<8x8x32xf32>
    %71 = vector.shape_cast %70 : vector<8x8x32xf32> to vector<64x32xf32>
    %72 = arith.truncf %71 : vector<64x32xf32> to vector<64x32xbf16>
    %c8_65 = arith.constant 8 : index
    %c0_66 = arith.constant 0 : index
    %c0_67 = arith.constant 0 : index
    %73 = vector.load %arg4[%c8_65, %c0_66, %c0_67] : memref<9x32x128xbf16, #tpu.memory_space<vmem>>, vector<1x32x128xbf16>
    %74 = vector.shape_cast %73 : vector<1x32x128xbf16> to vector<32x128xbf16>
    %cst_68 = arith.constant dense<0.000000e+00> : vector<64x128xf32>
    %75 = tpu.matmul %72, %74, %cst_68 {dimension_numbers = #tpu.dot_dimension_numbers<[1], [0], [0], [1], [0, 0, 1, 1], [], []>} : vector<64x32xbf16>, vector<32x128xbf16>, vector<64x128xf32> -> vector<64x128xf32>
    %76 = arith.addf %69, %75 : vector<64x128xf32>
    %c0_69 = arith.constant 0 : index
    %c0_70 = arith.constant 0 : index
    %77 = vector.load %arg5[%c0_69, %c0_70] : memref<1x128xf32, #tpu.memory_space<vmem>>, vector<1x128xf32>
    %78 = vector.broadcast %77 : vector<1x128xf32> to vector<64x128xf32>
    %79 = arith.addf %76, %78 : vector<64x128xf32>
    %cst_71 = arith.constant 0.000000e+00 : f32
    %80 = vector.broadcast %cst_71 : f32 to vector<64x128xf32>
    %81 = arith.maximumf %79, %80 : vector<64x128xf32>
    %c0_72 = arith.constant 0 : index
    %c0_73 = arith.constant 0 : index
    %c0_74 = arith.constant 0 : index
    %82 = vector.load %arg6[%c0_72, %c0_73, %c0_74] : memref<1x64x128xf32, #tpu.memory_space<vmem>>, vector<1x64x128xf32>
    %83 = vector.shape_cast %82 : vector<1x64x128xf32> to vector<64x128xf32>
    %84 = vector.shape_cast %81 : vector<64x128xf32> to vector<1x64x128xf32>
    tpu.vector_store %arg6[%c0_72, %c0_73, %c0_74], %84 {strides = array<i32>} : memref<1x64x128xf32, #tpu.memory_space<vmem>>, vector<1x64x128xf32>,
    return
  }
  func.func @transform_0(%arg0: i32) -> (i32, i32, i32) {
    %c0_i32 = arith.constant 0 : i32
    %c0_i32_0 = arith.constant 0 : i32
    %c0_i32_1 = arith.constant 0 : i32
    return %arg0, %c0_i32, %c0_i32_0 : i32, i32, i32
  }
  func.func @transform_1(%arg0: i32) -> (i32, i32) {
    %c0_i32 = arith.constant 0 : i32
    %c0_i32_0 = arith.constant 0 : i32
    %c0_i32_1 = arith.constant 0 : i32
    return %c0_i32, %c0_i32_0 : i32, i32
  }
  func.func @transform_2(%arg0: i32) -> (i32, i32) {
    %c0_i32 = arith.constant 0 : i32
    %c0_i32_0 = arith.constant 0 : i32
    %c0_i32_1 = arith.constant 0 : i32
    return %c0_i32, %c0_i32_0 : i32, i32
  }
  func.func @transform_3(%arg0: i32) -> (i32, i32, i32) {
    %c0_i32 = arith.constant 0 : i32
    %c0_i32_0 = arith.constant 0 : i32
    %c0_i32_1 = arith.constant 0 : i32
    %c0_i32_2 = arith.constant 0 : i32
    return %c0_i32, %c0_i32_0, %c0_i32_1 : i32, i32, i32
  }
  func.func @transform_4(%arg0: i32) -> (i32, i32) {
    %c0_i32 = arith.constant 0 : i32
    %c0_i32_0 = arith.constant 0 : i32
    %c0_i32_1 = arith.constant 0 : i32
    return %c0_i32, %c0_i32_0 : i32, i32
  }
  func.func @transform_5(%arg0: i32) -> (i32, i32, i32) {
    %c0_i32 = arith.constant 0 : i32
    %c0_i32_0 = arith.constant 0 : i32
    %c0_i32_1 = arith.constant 0 : i32
    return %arg0, %c0_i32, %c0_i32_0 : i32, i32, i32
  }
}

</mosaic_0001>

<llo_original>
// kernel: down_block.1
$region0: #{down_block.1}
  #allocation0 [shape = 'u32[]', space=smem, size = 0x4, offset = 0x4, fixed_abs, tag = 'smem constant byte address 0x4 - core index']
  #allocation1 [shape = 'u32[144,128]{1,0:T(1,128)}', space=vmem, size = 0x12000, scoped, tag = 'internal scratch']
  #allocation2 [shape = 'f32[18,25,32]{2,1,0:T(8,128)}', space=vmem, size = 0x48000, scoped, tag = 'scratch operand']
  %s0 = inlined_call_operand.vmem [shape: bf16[2,256,64], index: 0, kind: input, shape index: {}]
  %s1 = inlined_call_operand.vmem [shape: bf16[64,32], index: 1, kind: input, shape index: {}]
  %s2 = inlined_call_operand.vmem [shape: f32[1,32], index: 2, kind: input, shape index: {}]
  %s3 = inlined_call_operand.vmem [shape: bf16[9,32,128], index: 3, kind: input, shape index: {}]
  %s4 = inlined_call_operand.vmem [shape: f32[1,128], index: 4, kind: input, shape index: {}]
  %s5 = inlined_call_operand.vmem [shape: f32[2,64,128], index: 5, kind: output, shape index: {}]
  %s6 = sld [smem:[#allocation0]]
  $region53: #{down_block.1} parent=0
    _
  %s8 = ssub.s32 1, %s6
  %s9 = scalar_select 0, %s8, %s6
  loop: start=0, step=1, limit=4
  $region2: #{down_block.1} parent=0 // loop_pre_header
    _
  $region3: #{down_block.1} parent=0 // loop_header
    %s11 = sphi 0, %s15
    %p12 = scmp.ge.s32.totalorder %s11, 4
    %s21 = sphi 0, %s23
    %s24 = sphi 0, %s21
    %s25 = sphi 0, %s24
    %s41 = sphi 0, %s25
    %s45 = sphi 0, %s45
    %s47 = sphi 0, %s45
    %s48 = sphi 0, %s47
    %s62 = sphi 0, %s48
    %s66 = sphi 0, %s66
    %s68 = sphi 0, %s66
    %s69 = sphi 0, %s68
    %s83 = sphi 0, %s69
    %s87 = sphi 0, %s87
    %s89 = sphi 0, %s87
    %s90 = sphi 0, %s89
    %s104 = sphi 0, %s90
    %s108 = sphi 0, %s108
    %s110 = sphi 0, %s108
    %s111 = sphi 0, %s110
    %s125 = sphi 0, %s111
    %s131 = sphi 0, %s133
    %s134 = sphi 0, %s131
    %s135 = sphi 0, %s134
    %s151 = sphi 0, %s135
  $region4: #{down_block.1} parent=0 // loop_header_branch
    %14 = sbr.rel (%p12) target = $region8
  $region5: #{down_block.1} parent=0 // loop_body
    %s16 = ssub.s32 %s11, 1
    %s17 = ssub.s32 %s11, 2
    %s18 = sadd.s32 %s11, 1
    %s19 = ssub.s32 %s11, %s18
    %p20 = scmp.eq.s32.totalorder %s19, 0
    %s22 = sadd.s32 %s21, 1
    %s23 = scalar_select %p20, %s21, %s22
    %p26 = pneg %p20
    %p27 = scmp.eq.s32.totalorder %s11, 1
    %p28 = por %p26, %p27
    %p29 = scmp.ne.s32.totalorder %s21, %s24
    %p30 = scmp.eq.s32.totalorder %s11, 0
    %p31 = por %p29, %p30
    %p32 = scmp.ne.s32.totalorder %s21, %s24
    %p33 = scmp.eq.s32.totalorder %s16, 1
    %p34 = por %p32, %p33
    %p35 = scmp.ne.s32.totalorder %s24, %s25
    %p36 = scmp.eq.s32.totalorder %s16, 0
    %p37 = por %p35, %p36
    %p38 = scmp.ne.s32.totalorder %s24, %s25
    %p39 = scmp.eq.s32.totalorder %s17, 1
    %p40 = por %p38, %p39
    %p42 = scmp.ne.s32.totalorder %s25, %s41
    %p43 = scmp.eq.s32.totalorder %s17, 0
    %p44 = por %p42, %p43
    %s46 = sadd.s32 %s45, 1
    %p49 = scmp.eq.s32.totalorder %s11, 1
    %p50 = scmp.ne.s32.totalorder %s45, %s47
    %p51 = scmp.eq.s32.totalorder %s11, 0
    %p52 = por %p50, %p51
    %p53 = scmp.ne.s32.totalorder %s45, %s47
    %p54 = scmp.eq.s32.totalorder %s16, 1
    %p55 = por %p53, %p54
    %p56 = scmp.ne.s32.totalorder %s47, %s48
    %p57 = scmp.eq.s32.totalorder %s16, 0
    %p58 = por %p56, %p57
    %p59 = scmp.ne.s32.totalorder %s47, %s48
    %p60 = scmp.eq.s32.totalorder %s17, 1
    %p61 = por %p59, %p60
    %p63 = scmp.ne.s32.totalorder %s48, %s62
    %p64 = scmp.eq.s32.totalorder %s17, 0
    %p65 = por %p63, %p64
    %s67 = sadd.s32 %s66, 1
    %p70 = scmp.eq.s32.totalorder %s11, 1
    %p71 = scmp.ne.s32.totalorder %s66, %s68
    %p72 = scmp.eq.s32.totalorder %s11, 0
    %p73 = por %p71, %p72
    %p74 = scmp.ne.s32.totalorder %s66, %s68
    %p75 = scmp.eq.s32.totalorder %s16, 1
    %p76 = por %p74, %p75
    %p77 = scmp.ne.s32.totalorder %s68, %s69
    %p78 = scmp.eq.s32.totalorder %s16, 0
    %p79 = por %p77, %p78
    %p80 = scmp.ne.s32.totalorder %s68, %s69
    %p81 = scmp.eq.s32.totalorder %s17, 1
    %p82 = por %p80, %p81
    %p84 = scmp.ne.s32.totalorder %s69, %s83
    %p85 = scmp.eq.s32.totalorder %s17, 0
    %p86 = por %p84, %p85
    %s88 = sadd.s32 %s87, 1
    %p91 = scmp.eq.s32.totalorder %s11, 1
    %p92 = scmp.ne.s32.totalorder %s87, %s89
    %p93 = scmp.eq.s32.totalorder %s11, 0
    %p94 = por %p92, %p93
    %p95 = scmp.ne.s32.totalorder %s87, %s89
    %p96 = scmp.eq.s32.totalorder %s16, 1
    %p97 = por %p95, %p96
    %p98 = scmp.ne.s32.totalorder %s89, %s90
    %p99 = scmp.eq.s32.totalorder %s16, 0
    %p100 = por %p98, %p99
    %p101 = scmp.ne.s32.totalorder %s89, %s90
    %p102 = scmp.eq.s32.totalorder %s17, 1
    %p103 = por %p101, %p102
    %p105 = scmp.ne.s32.totalorder %s90, %s104
    %p106 = scmp.eq.s32.totalorder %s17, 0
    %p107 = por %p105, %p106
    %s109 = sadd.s32 %s108, 1
    %p112 = scmp.eq.s32.totalorder %s11, 1
    %p113 = scmp.ne.s32.totalorder %s108, %s110
    %p114 = scmp.eq.s32.totalorder %s11, 0
    %p115 = por %p113, %p114
    %p116 = scmp.ne.s32.totalorder %s108, %s110
    %p117 = scmp.eq.s32.totalorder %s16, 1
    %p118 = por %p116, %p117
    %p119 = scmp.ne.s32.totalorder %s110, %s111
    %p120 = scmp.eq.s32.totalorder %s16, 0
    %p121 = por %p119, %p120
    %p122 = scmp.ne.s32.totalorder %s110, %s111
    %p123 = scmp.eq.s32.totalorder %s17, 1
    %p124 = por %p122, %p123
    %p126 = scmp.ne.s32.totalorder %s111, %s125
    %p127 = scmp.eq.s32.totalorder %s17, 0
    %p128 = por %p126, %p127
    %s129 = ssub.s32 %s11, %s18
    %p130 = scmp.eq.s32.totalorder %s129, 0
    %s132 = sadd.s32 %s131, 1
    %s133 = scalar_select %p130, %s131, %s132
    %p136 = pneg %p130
    %p137 = scmp.eq.s32.totalorder %s11, 1
    %p138 = por %p136, %p137
    %p139 = scmp.ne.s32.totalorder %s131, %s134
    %p140 = scmp.eq.s32.totalorder %s11, 0
    %p141 = por %p139, %p140
    %p142 = scmp.ne.s32.totalorder %s131, %s134
    %p143 = scmp.eq.s32.totalorder %s16, 1
    %p144 = por %p142, %p143
    %p145 = scmp.ne.s32.totalorder %s134, %s135
    %p146 = scmp.eq.s32.totalorder %s16, 0
    %p147 = por %p145, %p146
    %p148 = scmp.ne.s32.totalorder %s134, %s135
    %p149 = scmp.eq.s32.totalorder %s17, 1
    %p150 = por %p148, %p149
    %p152 = scmp.ne.s32.totalorder %s135, %s151
    %p153 = scmp.eq.s32.totalorder %s17, 0
    %p154 = por %p152, %p153
    %p155 = scmp.le.s32.totalorder 1, %s11
    %p156 = scmp.lt.s32.totalorder %s11, 3
    %p157 = pnand %p155, %p156
    %p158 = pneg %p157
    // Predicated region
    $region9: #{down_block.1} parent=5 // pred_check
      _
    $region10: #{down_block.1} parent=5 // pred_check_branch
      %160 = sbr.rel (%p157) target = $region12
    $region11: #{down_block.1} parent=5 // pred_region
      %s161 = ssub.s32 %s11, 1
      // Predicated region
      $region13: #{down_block.1} parent=11 // pred_check
        %p162 = pneg %p58
      $region14: #{down_block.1} parent=11 // pred_check_branch
        %164 = sbr.rel (%p162) target = $region16
      $region15: #{down_block.1} parent=11 // pred_region
        _
      $region16: #{down_block.1} parent=11 // pred_fallthru
        _
      // Predicated region
      $region17: #{down_block.1} parent=11 // pred_check
        %p165 = pneg %p79
      $region18: #{down_block.1} parent=11 // pred_check_branch
        %167 = sbr.rel (%p165) target = $region20
      $region19: #{down_block.1} parent=11 // pred_region
        _
      $region20: #{down_block.1} parent=11 // pred_fallthru
        _
      // Predicated region
      $region21: #{down_block.1} parent=11 // pred_check
        %p168 = pneg %p100
      $region22: #{down_block.1} parent=11 // pred_check_branch
        %170 = sbr.rel (%p168) target = $region24
      $region23: #{down_block.1} parent=11 // pred_region
        _
      $region24: #{down_block.1} parent=11 // pred_fallthru
        _
      // Predicated region
      $region25: #{down_block.1} parent=11 // pred_check
        %p171 = pneg %p121
      $region26: #{down_block.1} parent=11 // pred_check_branch
        %173 = sbr.rel (%p171) target = $region28
      $region27: #{down_block.1} parent=11 // pred_region
        _
      $region28: #{down_block.1} parent=11 // pred_fallthru
        _
    $region12: #{down_block.1} parent=5 // pred_fallthru
      _
    %p174 = scmp.lt.s32.totalorder %s11, 2
    // Predicated region
    $region29: #{down_block.1} parent=5 // pred_check
      %p175 = pneg %p174
    $region30: #{down_block.1} parent=5 // pred_check_branch
      %177 = sbr.rel (%p175) target = $region32
    $region31: #{down_block.1} parent=5 // pred_region
      // Predicated region
      $region33: #{down_block.1} parent=31 // pred_check
        %p178 = pneg %p31
      $region34: #{down_block.1} parent=31 // pred_check_branch
        %180 = sbr.rel (%p178) target = $region36
      $region35: #{down_block.1} parent=31 // pred_region
        %p181 = scmp.lt.s32.totalorder %s11, 1
        %s182 = scalar_select %p181, %s11, 1
        %s183 = smul.addr %s182, 32
        %s184 = smul.addr %s183, 4
        %s185 = scalar_lea.vmem %s0, %s184
      $region36: #{down_block.1} parent=31 // pred_fallthru
        _
    $region32: #{down_block.1} parent=5 // pred_fallthru
      _
    %p186 = scmp.le.s32.totalorder 1, %s11
    %p187 = scmp.lt.s32.totalorder %s11, 3
    %p188 = pnand %p186, %p187
    %p189 = pneg %p188
    // Predicated region
    $region37: #{down_block.1} parent=5 // pred_check
      _
    $region38: #{down_block.1} parent=5 // pred_check_branch
      %191 = sbr.rel (%p188) target = $region40
    $region39: #{down_block.1} parent=5 // pred_region
      %s192 = ssub.s32 %s11, 1
      %p193 = scmp.lt.s32.totalorder %s16, 1
      %s194 = scalar_select %p193, %s16, 1
      %s195 = smul.addr %s194, 32
      %s196 = smul.addr %s195, 4
      %s197 = scalar_lea.vmem %s0, %s196
      %p198 = pneg %p37
      %p199 = pneg %p34
      %p200 = pneg %p58
      %p201 = pneg %p55
      %p202 = pneg %p79
      %p203 = pneg %p76
      %p204 = pneg %p100
      %p205 = pneg %p97
      %p206 = pneg %p121
      %p207 = pneg %p118
      %p208 = pneg %p147
      %p209 = pneg %p144
      %p210 = scmp.lt.s32.totalorder %s16, 1
      %s211 = scalar_select %p210, %s16, 1
      %s212 = smul.addr %s211, 8
      %s213 = smul.addr %s212, 8
      %s214 = scalar_lea.vmem %s5, %s213
      %p215 = scmp.lt.s32.totalorder %s16, 1
      %s216 = scalar_select %p215, %s16, 1
      %s217 = smul.addr %s216, 32
      %s218 = smul.addr %s217, 4
      %s219 = scalar_lea.vmem %s0, %s218
      %p220 = scmp.lt.s32.totalorder %s16, 1
      %s221 = scalar_select %p220, %s16, 1
      %s222 = smul.addr %s221, 8
      %s223 = smul.addr %s222, 8
      %s224 = scalar_lea.vmem %s5, %s223
      %v226 = vld [vmem:[%s219] sm:$0xf]
      %v227 = vld [vmem:[%s219 + $0x4] sm:$0xf]
      %v228 = vld [vmem:[%s219 + $0x8] sm:$0xf]
      %v229 = vld [vmem:[%s219 + $0xc] sm:$0xf]
      %v230 = vld [vmem:[%s219 + $0x10] sm:$0xf]
      %v231 = vld [vmem:[%s219 + $0x14] sm:$0xf]
      %v232 = vld [vmem:[%s219 + $0x18] sm:$0xf]
      %v233 = vld [vmem:[%s219 + $0x1c] sm:$0xf]
      %v234 = vld [vmem:[%s219 + $0x20] sm:$0xf]
      %v235 = vld [vmem:[%s219 + $0x24] sm:$0xf]
      %v236 = vld [vmem:[%s219 + $0x28] sm:$0xf]
      %v237 = vld [vmem:[%s219 + $0x2c] sm:$0xf]
      %v238 = vld [vmem:[%s219 + $0x30] sm:$0xf]
      %v239 = vld [vmem:[%s219 + $0x34] sm:$0xf]
      %v240 = vld [vmem:[%s219 + $0x38] sm:$0xf]
      %v241 = vld [vmem:[%s219 + $0x3c] sm:$0xf]
      %v242 = vld [vmem:[%s219 + $0x40] sm:$0xf]
      %v243 = vld [vmem:[%s219 + $0x44] sm:$0xf]
      %v244 = vld [vmem:[%s219 + $0x48] sm:$0xf]
      %v245 = vld [vmem:[%s219 + $0x4c] sm:$0xf]
      %v246 = vld [vmem:[%s219 + $0x50] sm:$0xf]
      %v247 = vld [vmem:[%s219 + $0x54] sm:$0xf]
      %v248 = vld [vmem:[%s219 + $0x58] sm:$0xf]
      %v249 = vld [vmem:[%s219 + $0x5c] sm:$0xf]
      %v250 = vld [vmem:[%s219 + $0x60] sm:$0xf]
      %v251 = vld [vmem:[%s219 + $0x64] sm:$0xf]
      %v252 = vld [vmem:[%s219 + $0x68] sm:$0xf]
      %v253 = vld [vmem:[%s219 + $0x6c] sm:$0xf]
      %v254 = vld [vmem:[%s219 + $0x70] sm:$0xf]
      %v255 = vld [vmem:[%s219 + $0x74] sm:$0xf]
      %v256 = vld [vmem:[%s219 + $0x78] sm:$0xf]
      %v257 = vld [vmem:[%s219 + $0x7c] sm:$0xf]
      %v258 = vld [vmem:[%s1] sm:$0xf]
      %v259 = vld [vmem:[%s1 + $0x4] sm:$0xf]
      %v260 = vld [vmem:[%s1 + $0x8] sm:$0xf]
      %v261 = vld [vmem:[%s1 + $0xc] sm:$0xf]
      %v262 = vld [vmem:[%s1 + $0x10] sm:$0xf]
      %v263 = vld [vmem:[%s1 + $0x14] sm:$0xf]
      %v264 = vld [vmem:[%s1 + $0x18] sm:$0xf]
      %v265 = vld [vmem:[%s1 + $0x1c] sm:$0xf]
      %v266 = vld [vmem:[%s2] sm:$0x1]
      %v268 = vlaneseq
      %v269 = vshrl.u32 %v268, 7
      %v270 = vsub.s32 0, %v269
      %v271 = vrot.slane %v266, %v270
      %v305 = vunpack.c.l.b16 %v226
      %v306 = vunpack.c.l.b16 %v227
      %v307 = vunpack.c.l.b16 %v228
      %v308 = vunpack.c.l.b16 %v229
      %v309 = vunpack.c.l.b16 %v230
      %v310 = vunpack.c.l.b16 %v231
      %v311 = vunpack.c.l.b16 %v232
      %v312 = vunpack.c.l.b16 %v233
      %v313 = vunpack.c.l.b16 %v234
      %v314 = vunpack.c.l.b16 %v235
      %v315 = vunpack.c.l.b16 %v236
      %v316 = vunpack.c.l.b16 %v237
      %v317 = vunpack.c.l.b16 %v238
      %v318 = vunpack.c.l.b16 %v239
      %v319 = vunpack.c.l.b16 %v240
      %v320 = vunpack.c.l.b16 %v241
      %v321 = vunpack.c.l.b16 %v242
      %v322 = vunpack.c.l.b16 %v243
      %v323 = vunpack.c.l.b16 %v244
      %v324 = vunpack.c.l.b16 %v245
      %v325 = vunpack.c.l.b16 %v246
      %v326 = vunpack.c.l.b16 %v247
      %v327 = vunpack.c.l.b16 %v248
      %v328 = vunpack.c.l.b16 %v249
      %v329 = vunpack.c.l.b16 %v250
      %v330 = vunpack.c.l.b16 %v251
      %v331 = vunpack.c.l.b16 %v252
      %v332 = vunpack.c.l.b16 %v253
      %v333 = vunpack.c.l.b16 %v254
      %v334 = vunpack.c.l.b16 %v255
      %v335 = vunpack.c.l.b16 %v256
      %v336 = vunpack.c.l.b16 %v257
      %v337 = vpack.c.b16 %v306, %v305
      %v338 = vpack.c.b16 %v308, %v307
      %v339 = vpack.c.b16 %v310, %v309
      %v340 = vpack.c.b16 %v312, %v311
      %v341 = vpack.c.b16 %v314, %v313
      %v342 = vpack.c.b16 %v316, %v315
      %v343 = vpack.c.b16 %v318, %v317
      %v344 = vpack.c.b16 %v320, %v319
      %v345 = vpack.c.b16 %v322, %v321
      %v346 = vpack.c.b16 %v324, %v323
      %v347 = vpack.c.b16 %v326, %v325
      %v348 = vpack.c.b16 %v328, %v327
      %v349 = vpack.c.b16 %v330, %v329
      %v350 = vpack.c.b16 %v332, %v331
      %v351 = vpack.c.b16 %v334, %v333
      %v352 = vpack.c.b16 %v336, %v335
      %v361 = vunpack.c.l.b16 %v258
      %v362 = vunpack.c.l.b16 %v259
      %v363 = vunpack.c.l.b16 %v260
      %v364 = vunpack.c.l.b16 %v261
      %v365 = vunpack.c.l.b16 %v262
      %v366 = vunpack.c.l.b16 %v263
      %v367 = vunpack.c.l.b16 %v264
      %v368 = vunpack.c.l.b16 %v265
      %v369 = vpack.c.b16 %v362, %v361
      %v370 = vpack.c.b16 %v364, %v363
      %v371 = vpack.c.b16 %v366, %v365
      %v372 = vpack.c.b16 %v368, %v367
      %vm377 = vcmask 523264
      %v379 = vsel %vm377, %v337, 0
      %v382 = vsel %vm377, %v338, 0
      %v385 = vsel %vm377, %v339, 0
      %v388 = vsel %vm377, %v340, 0
      %v391 = vsel %vm377, %v341, 0
      %v394 = vsel %vm377, %v342, 0
      %v397 = vsel %vm377, %v343, 0
      %v400 = vsel %vm377, %v344, 0
      %v403 = vsel %vm377, %v345, 0
      %v406 = vsel %vm377, %v346, 0
      %v409 = vsel %vm377, %v347, 0
      %v412 = vsel %vm377, %v348, 0
      %v415 = vsel %vm377, %v349, 0
      %v418 = vsel %vm377, %v350, 0
      %v421 = vsel %vm377, %v351, 0
      %v424 = vsel %vm377, %v352, 0
      %426 = vmatprep.subr.bf16.mxu0 0
      %427 = vmatpush1.bf16.msra.mxu0 0
      %428 = vmatprep.subr.bf16.mxu0 0
      %429 = vmatpush1.bf16.msra.mxu0 0
      %430 = vmatprep.subr.bf16.mxu0 0
      %431 = vmatpush1.bf16.msra.mxu0 0
      %432 = vmatprep.subr.bf16.mxu0 0
      %433 = vmatpush1.bf16.msra.mxu0 0
      %434 = vmatprep.subr.bf16.mxu0 0
      %435 = vmatpush1.bf16.msra.mxu0 %v372
      %436 = vmatprep.subr.bf16.mxu0 0
      %437 = vmatpush1.bf16.msra.mxu0 %v371
      %438 = vmatprep.subr.bf16.mxu0 0
      %439 = vmatpush1.bf16.msra.mxu0 %v370
      %440 = vmatprep.subr.bf16.mxu0 0
      %441 = vmatpush1.bf16.msra.mxu0 %v369
      %442 = vmatprep.subr.bf16.mxu0 0
      %443 = vmatpush2.bf16.msra.mxu0 0
      %444 = vmatprep.subr.bf16.mxu0 0
      %445 = vmatpush2.bf16.msra.mxu0 0
      %446 = vmatprep.subr.bf16.mxu0 0
      %447 = vmatpush2.bf16.msra.mxu0 0
      %448 = vmatprep.subr.bf16.mxu0 0
      %449 = vmatpush2.bf16.msra.mxu0 0
      %450 = vmatprep.subr.bf16.mxu0 0
      %451 = vmatpush2.bf16.msra.mxu0 0
      %452 = vmatprep.subr.bf16.mxu0 0
      %453 = vmatpush2.bf16.msra.mxu0 0
      %454 = vmatprep.subr.bf16.mxu0 0
      %455 = vmatpush2.bf16.msra.mxu0 0
      %456 = vmatprep.subr.bf16.mxu0 0
      %457 = vmatpush2.bf16.msra.mxu0 0
      %458 = vmatprep.mubr.bf16.mxu0 0
      %459 = vmatmul.mubr.bf16.gmra.mxu0 %v379
      %v460 = vpop.f32.mrf.mxu0
      %v461 = vadd.f32 %v271, %v460
      %v462 = vpop.f32.mrf.mxu0
      %v463 = vpop.f32.mrf.mxu0
      %v464 = vadd.f32 %v271, %v463
      %v465 = vpop.f32.mrf.mxu0
      %466 = vmatprep.mubr.bf16.mxu0 0
      %467 = vmatmul.mubr.bf16.gmra.mxu0 %v382
      %v468 = vpop.f32.mrf.mxu0
      %v469 = vadd.f32 %v271, %v468
      %v470 = vpop.f32.mrf.mxu0
      %v471 = vpop.f32.mrf.mxu0
      %v472 = vadd.f32 %v271, %v471
      %v473 = vpop.f32.mrf.mxu0
      %474 = vmatprep.mubr.bf16.mxu0 0
      %475 = vmatmul.mubr.bf16.gmra.mxu0 %v385
      %v476 = vpop.f32.mrf.mxu0
      %v477 = vadd.f32 %v271, %v476
      %v478 = vpop.f32.mrf.mxu0
      %v479 = vpop.f32.mrf.mxu0
      %v480 = vadd.f32 %v271, %v479
      %v481 = vpop.f32.mrf.mxu0
      %482 = vmatprep.mubr.bf16.mxu0 0
      %483 = vmatmul.mubr.bf16.gmra.mxu0 %v388
      %v484 = vpop.f32.mrf.mxu0
      %v485 = vadd.f32 %v271, %v484
      %v486 = vpop.f32.mrf.mxu0
      %v487 = vpop.f32.mrf.mxu0
      %v488 = vadd.f32 %v271, %v487
      %v489 = vpop.f32.mrf.mxu0
      %490 = vmatprep.mubr.bf16.mxu0 0
      %491 = vmatmul.mubr.bf16.gmra.mxu0 %v391
      %v492 = vpop.f32.mrf.mxu0
      %v493 = vadd.f32 %v271, %v492
      %v494 = vpop.f32.mrf.mxu0
      %v495 = vpop.f32.mrf.mxu0
      %v496 = vadd.f32 %v271, %v495
      %v497 = vpop.f32.mrf.mxu0
      %498 = vmatprep.mubr.bf16.mxu0 0
      %499 = vmatmul.mubr.bf16.gmra.mxu0 %v394
      %v500 = vpop.f32.mrf.mxu0
      %v501 = vadd.f32 %v271, %v500
      %v502 = vpop.f32.mrf.mxu0
      %v503 = vpop.f32.mrf.mxu0
      %v504 = vadd.f32 %v271, %v503
      %v505 = vpop.f32.mrf.mxu0
      %506 = vmatprep.mubr.bf16.mxu0 0
      %507 = vmatmul.mubr.bf16.gmra.mxu0 %v397
      %v508 = vpop.f32.mrf.mxu0
      %v509 = vadd.f32 %v271, %v508
      %v510 = vpop.f32.mrf.mxu0
      %v511 = vpop.f32.mrf.mxu0
      %v512 = vadd.f32 %v271, %v511
      %v513 = vpop.f32.mrf.mxu0
      %514 = vmatprep.mubr.bf16.mxu0 0
      %515 = vmatmul.mubr.bf16.gmra.mxu0 %v400
      %v516 = vpop.f32.mrf.mxu0
      %v517 = vadd.f32 %v271, %v516
      %v518 = vpop.f32.mrf.mxu0
      %v519 = vpop.f32.mrf.mxu0
      %v520 = vadd.f32 %v271, %v519
      %v521 = vpop.f32.mrf.mxu0
      %522 = vmatprep.mubr.bf16.mxu0 0
      %523 = vmatmul.mubr.bf16.gmra.mxu0 %v403
      %v524 = vpop.f32.mrf.mxu0
      %v525 = vadd.f32 %v271, %v524
      %v526 = vpop.f32.mrf.mxu0
      %v527 = vpop.f32.mrf.mxu0
      %v528 = vadd.f32 %v271, %v527
      %v529 = vpop.f32.mrf.mxu0
      %530 = vmatprep.mubr.bf16.mxu0 0
      %531 = vmatmul.mubr.bf16.gmra.mxu0 %v406
      %v532 = vpop.f32.mrf.mxu0
      %v533 = vadd.f32 %v271, %v532
      %v534 = vpop.f32.mrf.mxu0
      %v535 = vpop.f32.mrf.mxu0
      %v536 = vadd.f32 %v271, %v535
      %v537 = vpop.f32.mrf.mxu0
      %538 = vmatprep.mubr.bf16.mxu0 0
      %539 = vmatmul.mubr.bf16.gmra.mxu0 %v409
      %v540 = vpop.f32.mrf.mxu0
      %v541 = vadd.f32 %v271, %v540
      %v542 = vpop.f32.mrf.mxu0
      %v543 = vpop.f32.mrf.mxu0
      %v544 = vadd.f32 %v271, %v543
      %v545 = vpop.f32.mrf.mxu0
      %546 = vmatprep.mubr.bf16.mxu0 0
      %547 = vmatmul.mubr.bf16.gmra.mxu0 %v412
      %v548 = vpop.f32.mrf.mxu0
      %v549 = vadd.f32 %v271, %v548
      %v550 = vpop.f32.mrf.mxu0
      %v551 = vpop.f32.mrf.mxu0
      %v552 = vadd.f32 %v271, %v551
      %v553 = vpop.f32.mrf.mxu0
      %554 = vmatprep.mubr.bf16.mxu0 0
      %555 = vmatmul.mubr.bf16.gmra.mxu0 %v415
      %v556 = vpop.f32.mrf.mxu0
      %v557 = vadd.f32 %v271, %v556
      %v558 = vpop.f32.mrf.mxu0
      %v559 = vpop.f32.mrf.mxu0
      %v560 = vadd.f32 %v271, %v559
      %v561 = vpop.f32.mrf.mxu0
      %562 = vmatprep.mubr.bf16.mxu0 0
      %563 = vmatmul.mubr.bf16.gmra.mxu0 %v418
      %v564 = vpop.f32.mrf.mxu0
      %v565 = vadd.f32 %v271, %v564
      %v566 = vpop.f32.mrf.mxu0
      %v567 = vpop.f32.mrf.mxu0
      %v568 = vadd.f32 %v271, %v567
      %v569 = vpop.f32.mrf.mxu0
      %570 = vmatprep.mubr.bf16.mxu0 0
      %571 = vmatmul.mubr.bf16.gmra.mxu0 %v421
      %v572 = vpop.f32.mrf.mxu0
      %v573 = vadd.f32 %v271, %v572
      %v574 = vpop.f32.mrf.mxu0
      %v575 = vpop.f32.mrf.mxu0
      %v576 = vadd.f32 %v271, %v575
      %v577 = vpop.f32.mrf.mxu0
      %578 = vmatprep.mubr.bf16.mxu0 0
      %579 = vmatmul.mubr.bf16.gmra.mxu0 %v424
      %v580 = vpop.f32.mrf.mxu0
      %v581 = vadd.f32 %v271, %v580
      %v582 = vpop.f32.mrf.mxu0
      %v583 = vpop.f32.mrf.mxu0
      %v584 = vadd.f32 %v271, %v583
      %v585 = vpop.f32.mrf.mxu0
      %586 = vdwg.mxu0
      %v587 = vmax.f32 %v461, 0.0
      %v588 = vmax.f32 %v464, 0.0
      %v589 = vmax.f32 %v469, 0.0
      %v590 = vmax.f32 %v472, 0.0
      %v591 = vmax.f32 %v477, 0.0
      %v592 = vmax.f32 %v480, 0.0
      %v593 = vmax.f32 %v485, 0.0
      %v594 = vmax.f32 %v488, 0.0
      %v595 = vmax.f32 %v493, 0.0
      %v596 = vmax.f32 %v496, 0.0
      %v597 = vmax.f32 %v501, 0.0
      %v598 = vmax.f32 %v504, 0.0
      %v599 = vmax.f32 %v509, 0.0
      %v600 = vmax.f32 %v512, 0.0
      %v601 = vmax.f32 %v517, 0.0
      %v602 = vmax.f32 %v520, 0.0
      %v603 = vmax.f32 %v525, 0.0
      %v604 = vmax.f32 %v528, 0.0
      %v605 = vmax.f32 %v533, 0.0
      %v606 = vmax.f32 %v536, 0.0
      %v607 = vmax.f32 %v541, 0.0
      %v608 = vmax.f32 %v544, 0.0
      %v609 = vmax.f32 %v549, 0.0
      %v610 = vmax.f32 %v552, 0.0
      %v611 = vmax.f32 %v557, 0.0
      %v612 = vmax.f32 %v560, 0.0
      %v613 = vmax.f32 %v565, 0.0
      %v614 = vmax.f32 %v568, 0.0
      %v615 = vmax.f32 %v573, 0.0
      %v616 = vmax.f32 %v576, 0.0
      %v617 = vmax.f32 %v581, 0.0
      %v618 = vmax.f32 %v584, 0.0
      %vm619 = vcmask 261120
      %620 = vst.msk [vmem:[#allocation2] sm:$0xff] %vm619, 0.0
      %621 = vst.msk [vmem:[#allocation2 + $0x8] sm:$0xff] %vm619, 0.0
      %622 = vst.msk [vmem:[#allocation2 + $0x10] sm:$0xff] %vm619, 0.0
      %vm623 = vcmask 253952
      %624 = vst.msk [vmem:[#allocation2 + $0x18] sm:$0x1] %vm623, 0.0
      %625 = vst.msk [vmem:[#allocation2 + $0x20] sm:$0xff] %vm619, 0.0
      %626 = vst.msk [vmem:[#allocation2 + $0x28] sm:$0xff] %vm619, 0.0
      %627 = vst.msk [vmem:[#allocation2 + $0x30] sm:$0xff] %vm619, 0.0
      %628 = vst.msk [vmem:[#allocation2 + $0x38] sm:$0x1] %vm623, 0.0
      %629 = vst.msk [vmem:[#allocation2 + $0x40] sm:$0xff] %vm619, 0.0
      %630 = vst.msk [vmem:[#allocation2 + $0x48] sm:$0xff] %vm619, 0.0
      %631 = vst.msk [vmem:[#allocation2 + $0x50] sm:$0xff] %vm619, 0.0
      %632 = vst.msk [vmem:[#allocation2 + $0x58] sm:$0x1] %vm623, 0.0
      %633 = vst.msk [vmem:[#allocation2 + $0x60] sm:$0xff] %vm619, 0.0
      %634 = vst.msk [vmem:[#allocation2 + $0x68] sm:$0xff] %vm619, 0.0
      %635 = vst.msk [vmem:[#allocation2 + $0x70] sm:$0xff] %vm619, 0.0
      %636 = vst.msk [vmem:[#allocation2 + $0x78] sm:$0x1] %vm623, 0.0
      %637 = vst.msk [vmem:[#allocation2 + $0x80] sm:$0xff] %vm619, 0.0
      %638 = vst.msk [vmem:[#allocation2 + $0x88] sm:$0xff] %vm619, 0.0
      %639 = vst.msk [vmem:[#allocation2 + $0x90] sm:$0xff] %vm619, 0.0
      %640 = vst.msk [vmem:[#allocation2 + $0x98] sm:$0x1] %vm623, 0.0
      %641 = vst.msk [vmem:[#allocation2 + $0xa0] sm:$0xff] %vm619, 0.0
      %642 = vst.msk [vmem:[#allocation2 + $0xa8] sm:$0xff] %vm619, 0.0
      %643 = vst.msk [vmem:[#allocation2 + $0xb0] sm:$0xff] %vm619, 0.0
      %644 = vst.msk [vmem:[#allocation2 + $0xb8] sm:$0x1] %vm623, 0.0
      %645 = vst.msk [vmem:[#allocation2 + $0xc0] sm:$0xff] %vm619, 0.0
      %646 = vst.msk [vmem:[#allocation2 + $0xc8] sm:$0xff] %vm619, 0.0
      %647 = vst.msk [vmem:[#allocation2 + $0xd0] sm:$0xff] %vm619, 0.0
      %648 = vst.msk [vmem:[#allocation2 + $0xd8] sm:$0x1] %vm623, 0.0
      %649 = vst.msk [vmem:[#allocation2 + $0xe0] sm:$0xff] %vm619, 0.0
      %650 = vst.msk [vmem:[#allocation2 + $0xe8] sm:$0xff] %vm619, 0.0
      %651 = vst.msk [vmem:[#allocation2 + $0xf0] sm:$0xff] %vm619, 0.0
      %652 = vst.msk [vmem:[#allocation2 + $0xf8] sm:$0x1] %vm623, 0.0
      %653 = vst.msk [vmem:[#allocation2 + $0x100] sm:$0xff] %vm619, 0.0
      %654 = vst.msk [vmem:[#allocation2 + $0x108] sm:$0xff] %vm619, 0.0
      %655 = vst.msk [vmem:[#allocation2 + $0x110] sm:$0xff] %vm619, 0.0
      %656 = vst.msk [vmem:[#allocation2 + $0x118] sm:$0x1] %vm623, 0.0
      %657 = vst.msk [vmem:[#allocation2 + $0x120] sm:$0xff] %vm619, 0.0
      %658 = vst.msk [vmem:[#allocation2 + $0x128] sm:$0xff] %vm619, 0.0
      %659 = vst.msk [vmem:[#allocation2 + $0x130] sm:$0xff] %vm619, 0.0
      %660 = vst.msk [vmem:[#allocation2 + $0x138] sm:$0x1] %vm623, 0.0
      %661 = vst.msk [vmem:[#allocation2 + $0x140] sm:$0xff] %vm619, 0.0
      %662 = vst.msk [vmem:[#allocation2 + $0x148] sm:$0xff] %vm619, 0.0
      %663 = vst.msk [vmem:[#allocation2 + $0x150] sm:$0xff] %vm619, 0.0
      %664 = vst.msk [vmem:[#allocation2 + $0x158] sm:$0x1] %vm623, 0.0
      %665 = vst.msk [vmem:[#allocation2 + $0x160] sm:$0xff] %vm619, 0.0
      %666 = vst.msk [vmem:[#allocation2 + $0x168] sm:$0xff] %vm619, 0.0
      %667 = vst.msk [vmem:[#allocation2 + $0x170] sm:$0xff] %vm619, 0.0
      %668 = vst.msk [vmem:[#allocation2 + $0x178] sm:$0x1] %vm623, 0.0
      %669 = vst.msk [vmem:[#allocation2 + $0x180] sm:$0xff] %vm619, 0.0
      %670 = vst.msk [vmem:[#allocation2 + $0x188] sm:$0xff] %vm619, 0.0
      %671 = vst.msk [vmem:[#allocation2 + $0x190] sm:$0xff] %vm619, 0.0
      %672 = vst.msk [vmem:[#allocation2 + $0x198] sm:$0x1] %vm623, 0.0
      %673 = vst.msk [vmem:[#allocation2 + $0x1a0] sm:$0xff] %vm619, 0.0
      %674 = vst.msk [vmem:[#allocation2 + $0x1a8] sm:$0xff] %vm619, 0.0
      %675 = vst.msk [vmem:[#allocation2 + $0x1b0] sm:$0xff] %vm619, 0.0
      %676 = vst.msk [vmem:[#allocation2 + $0x1b8] sm:$0x1] %vm623, 0.0
      %677 = vst.msk [vmem:[#allocation2 + $0x1c0] sm:$0xff] %vm619, 0.0
      %678 = vst.msk [vmem:[#allocation2 + $0x1c8] sm:$0xff] %vm619, 0.0
      %679 = vst.msk [vmem:[#allocation2 + $0x1d0] sm:$0xff] %vm619, 0.0
      %680 = vst.msk [vmem:[#allocation2 + $0x1d8] sm:$0x1] %vm623, 0.0
      %681 = vst.msk [vmem:[#allocation2 + $0x1e0] sm:$0xff] %vm619, 0.0
      %682 = vst.msk [vmem:[#allocation2 + $0x1e8] sm:$0xff] %vm619, 0.0
      %683 = vst.msk [vmem:[#allocation2 + $0x1f0] sm:$0xff] %vm619, 0.0
      %684 = vst.msk [vmem:[#allocation2 + $0x1f8] sm:$0x1] %vm623, 0.0
      %685 = vst.msk [vmem:[#allocation2 + $0x200] sm:$0xff] %vm619, 0.0
      %686 = vst.msk [vmem:[#allocation2 + $0x208] sm:$0xff] %vm619, 0.0
      %687 = vst.msk [vmem:[#allocation2 + $0x210] sm:$0xff] %vm619, 0.0
      %688 = vst.msk [vmem:[#allocation2 + $0x218] sm:$0x1] %vm623, 0.0
      %689 = vst.msk [vmem:[#allocation2 + $0x220] sm:$0xff] %vm619, 0.0
      %690 = vst.msk [vmem:[#allocation2 + $0x228] sm:$0xff] %vm619, 0.0
      %691 = vst.msk [vmem:[#allocation2 + $0x230] sm:$0xff] %vm619, 0.0
      %692 = vst.msk [vmem:[#allocation2 + $0x238] sm:$0x1] %vm623, 0.0
      %s693 = scalar_lea.vmem [#allocation2], 32
      %694 = vst.msk [vmem:[%s693 + $0x8] sm:$0xff] %vm619, %v587
      %695 = vst.msk [vmem:[%s693 + $0x10] sm:$0xff] %vm619, %v588
      %696 = vst.msk [vmem:[%s693 + $0x28] sm:$0xff] %vm619, %v589
      %697 = vst.msk [vmem:[%s693 + $0x30] sm:$0xff] %vm619, %v590
      %698 = vst.msk [vmem:[%s693 + $0x48] sm:$0xff] %vm619, %v591
      %699 = vst.msk [vmem:[%s693 + $0x50] sm:$0xff] %vm619, %v592
      %700 = vst.msk [vmem:[%s693 + $0x68] sm:$0xff] %vm619, %v593
      %701 = vst.msk [vmem:[%s693 + $0x70] sm:$0xff] %vm619, %v594
      %702 = vst.msk [vmem:[%s693 + $0x88] sm:$0xff] %vm619, %v595
      %703 = vst.msk [vmem:[%s693 + $0x90] sm:$0xff] %vm619, %v596
      %704 = vst.msk [vmem:[%s693 + $0xa8] sm:$0xff] %vm619, %v597
      %705 = vst.msk [vmem:[%s693 + $0xb0] sm:$0xff] %vm619, %v598
      %706 = vst.msk [vmem:[%s693 + $0xc8] sm:$0xff] %vm619, %v599
      %707 = vst.msk [vmem:[%s693 + $0xd0] sm:$0xff] %vm619, %v600
      %708 = vst.msk [vmem:[%s693 + $0xe8] sm:$0xff] %vm619, %v601
      %709 = vst.msk [vmem:[%s693 + $0xf0] sm:$0xff] %vm619, %v602
      %710 = vst.msk [vmem:[%s693 + $0x108] sm:$0xff] %vm619, %v603
      %711 = vst.msk [vmem:[%s693 + $0x110] sm:$0xff] %vm619, %v604
      %712 = vst.msk [vmem:[%s693 + $0x128] sm:$0xff] %vm619, %v605
      %713 = vst.msk [vmem:[%s693 + $0x130] sm:$0xff] %vm619, %v606
      %714 = vst.msk [vmem:[%s693 + $0x148] sm:$0xff] %vm619, %v607
      %715 = vst.msk [vmem:[%s693 + $0x150] sm:$0xff] %vm619, %v608
      %716 = vst.msk [vmem:[%s693 + $0x168] sm:$0xff] %vm619, %v609
      %717 = vst.msk [vmem:[%s693 + $0x170] sm:$0xff] %vm619, %v610
      %718 = vst.msk [vmem:[%s693 + $0x188] sm:$0xff] %vm619, %v611
      %719 = vst.msk [vmem:[%s693 + $0x190] sm:$0xff] %vm619, %v612
      %720 = vst.msk [vmem:[%s693 + $0x1a8] sm:$0xff] %vm619, %v613
      %721 = vst.msk [vmem:[%s693 + $0x1b0] sm:$0xff] %vm619, %v614
      %722 = vst.msk [vmem:[%s693 + $0x1c8] sm:$0xff] %vm619, %v615
      %723 = vst.msk [vmem:[%s693 + $0x1d0] sm:$0xff] %vm619, %v616
      %724 = vst.msk [vmem:[%s693 + $0x1e8] sm:$0xff] %vm619, %v617
      %725 = vst.msk [vmem:[%s693 + $0x1f0] sm:$0xff] %vm619, %v618
      %s726 = scalar_lea.vmem [#allocation2], 7
      %v727 = vld [vmem:[%s726] ss:$2 sm:$0xff]
      %s728 = scalar_lea.vmem [#allocation2], 71
      %v729 = vld [vmem:[%s728] ss:$2 sm:$0xff]
      %s730 = scalar_lea.vmem [#allocation2], 135
      %v731 = vld [vmem:[%s730] ss:$2 sm:$0xff]
      %s732 = scalar_lea.vmem [#allocation2], 199
      %v733 = vld [vmem:[%s732] ss:$2 sm:$0xff]
      %s734 = scalar_lea.vmem [#allocation2], 263
      %v735 = vld [vmem:[%s734] ss:$2 sm:$0xff]
      %s736 = scalar_lea.vmem [#allocation2], 327
      %v737 = vld [vmem:[%s736] ss:$2 sm:$0xff]
      %s738 = scalar_lea.vmem [#allocation2], 391
      %v739 = vld [vmem:[%s738] ss:$2 sm:$0xff]
      %s740 = scalar_lea.vmem [#allocation2], 455
      %v741 = vld [vmem:[%s740] ss:$2 sm:$0xff]
      %v742 = vpack.c.bf16 %v729, %v727
      %v743 = vpack.c.bf16 %v733, %v731
      %v744 = vpack.c.bf16 %v737, %v735
      %v745 = vpack.c.bf16 %v741, %v739
      %v746 = vld [vmem:[%s3] sm:$0xf]
      %v747 = vld [vmem:[%s3 + $0x4] sm:$0xf]
      %v748 = vld [vmem:[%s3 + $0x8] sm:$0xf]
      %v749 = vld [vmem:[%s3 + $0xc] sm:$0xf]
      %s750 = scalar_lea.vmem [#allocation2], 8
      %v751 = vld [vmem:[%s750] ss:$2 sm:$0xff]
      %s752 = scalar_lea.vmem [#allocation2], 72
      %v753 = vld [vmem:[%s752] ss:$2 sm:$0xff]
      %s754 = scalar_lea.vmem [#allocation2], 136
      %v755 = vld [vmem:[%s754] ss:$2 sm:$0xff]
      %s756 = scalar_lea.vmem [#allocation2], 200
      %v757 = vld [vmem:[%s756] ss:$2 sm:$0xff]
      %s758 = scalar_lea.vmem [#allocation2], 264
      %v759 = vld [vmem:[%s758] ss:$2 sm:$0xff]
      %s760 = scalar_lea.vmem [#allocation2], 328
      %v761 = vld [vmem:[%s760] ss:$2 sm:$0xff]
      %s762 = scalar_lea.vmem [#allocation2], 392
      %v763 = vld [vmem:[%s762] ss:$2 sm:$0xff]
      %s764 = scalar_lea.vmem [#allocation2], 456
      %v765 = vld [vmem:[%s764] ss:$2 sm:$0xff]
      %v766 = vpack.c.bf16 %v753, %v751
      %v767 = vpack.c.bf16 %v757, %v755
      %v768 = vpack.c.bf16 %v761, %v759
      %v769 = vpack.c.bf16 %v765, %v763
      %s770 = scalar_lea.vmem %s3, 16
      %v771 = vld [vmem:[%s770] sm:$0xf]
      %v772 = vld [vmem:[%s770 + $0x4] sm:$0xf]
      %v773 = vld [vmem:[%s770 + $0x8] sm:$0xf]
      %v774 = vld [vmem:[%s770 + $0xc] sm:$0xf]
      %v779 = vunpack.c.l.b16 %v771
      %v780 = vunpack.c.l.b16 %v772
      %v781 = vunpack.c.l.b16 %v773
      %v782 = vunpack.c.l.b16 %v774
      %v783 = vpack.c.b16 %v780, %v779
      %v784 = vpack.c.b16 %v782, %v781
      %v788 = vsel %vm619, %v766, 0
      %v791 = vsel %vm619, %v767, 0
      %v794 = vsel %vm619, %v768, 0
      %v797 = vsel %vm619, %v769, 0
      %799 = vmatprep.subr.bf16.mxu0 0
      %800 = vmatpush1.bf16.msra.mxu0 0
      %801 = vmatprep.subr.bf16.mxu0 0
      %802 = vmatpush1.bf16.msra.mxu0 0
      %803 = vmatprep.subr.bf16.mxu0 0
      %804 = vmatpush1.bf16.msra.mxu0 0
      %805 = vmatprep.subr.bf16.mxu0 0
      %806 = vmatpush1.bf16.msra.mxu0 0
      %807 = vmatprep.subr.bf16.mxu0 0
      %808 = vmatpush1.bf16.msra.mxu0 0
      %809 = vmatprep.subr.bf16.mxu0 0
      %810 = vmatpush1.bf16.msra.mxu0 0
      %811 = vmatprep.subr.bf16.mxu0 0
      %812 = vmatpush1.bf16.msra.mxu0 %v784
      %813 = vmatprep.subr.bf16.mxu0 0
      %814 = vmatpush1.bf16.msra.mxu0 %v783
      %815 = vmatprep.subr.bf16.mxu0 0
      %816 = vmatpush2.bf16.msra.mxu0 0
      %817 = vmatprep.subr.bf16.mxu0 0
      %818 = vmatpush2.bf16.msra.mxu0 0
      %819 = vmatprep.subr.bf16.mxu0 0
      %820 = vmatpush2.bf16.msra.mxu0 0
      %821 = vmatprep.subr.bf16.mxu0 0
      %822 = vmatpush2.bf16.msra.mxu0 0
      %823 = vmatprep.subr.bf16.mxu0 0
      %824 = vmatpush2.bf16.msra.mxu0 0
      %825 = vmatprep.subr.bf16.mxu0 0
      %826 = vmatpush2.bf16.msra.mxu0 0
      %827 = vmatprep.subr.bf16.mxu0 0
      %828 = vmatpush2.bf16.msra.mxu0 0
      %829 = vmatprep.subr.bf16.mxu0 0
      %830 = vmatpush2.bf16.msra.mxu0 0
      %831 = vmatprep.mubr.bf16.mxu0 0
      %832 = vmatmul.mubr.bf16.gmra.mxu0 %v788
      %v833 = vpop.f32.mrf.mxu0
      %v834 = vadd.f32 0.0, %v833
      %v835 = vpop.f32.mrf.mxu0
      %v836 = vpop.f32.mrf.mxu0
      %v837 = vadd.f32 0.0, %v836
      %v838 = vpop.f32.mrf.mxu0
      %839 = vmatprep.mubr.bf16.mxu0 0
      %840 = vmatmul.mubr.bf16.gmra.mxu0 %v791
      %v841 = vpop.f32.mrf.mxu0
      %v842 = vadd.f32 0.0, %v841
      %v843 = vpop.f32.mrf.mxu0
      %v844 = vpop.f32.mrf.mxu0
      %v845 = vadd.f32 0.0, %v844
      %v846 = vpop.f32.mrf.mxu0
      %847 = vmatprep.mubr.bf16.mxu0 0
      %848 = vmatmul.mubr.bf16.gmra.mxu0 %v794
      %v849 = vpop.f32.mrf.mxu0
      %v850 = vadd.f32 0.0, %v849
      %v851 = vpop.f32.mrf.mxu0
      %v852 = vpop.f32.mrf.mxu0
      %v853 = vadd.f32 0.0, %v852
      %v854 = vpop.f32.mrf.mxu0
      %855 = vmatprep.mubr.bf16.mxu0 0
      %856 = vmatmul.mubr.bf16.gmra.mxu0 %v797
      %v857 = vpop.f32.mrf.mxu0
      %v858 = vadd.f32 0.0, %v857
      %v859 = vpop.f32.mrf.mxu0
      %v860 = vpop.f32.mrf.mxu0
      %v861 = vadd.f32 0.0, %v860
      %v862 = vpop.f32.mrf.mxu0
      %863 = vdwg.mxu0
      %v868 = vunpack.c.l.b16 %v746
      %v869 = vunpack.c.l.b16 %v747
      %v870 = vunpack.c.l.b16 %v748
      %v871 = vunpack.c.l.b16 %v749
      %v872 = vpack.c.b16 %v869, %v868
      %v873 = vpack.c.b16 %v871, %v870
      %v877 = vsel %vm619, %v742, 0
      %v880 = vsel %vm619, %v743, 0
      %v883 = vsel %vm619, %v744, 0
      %v886 = vsel %vm619, %v745, 0
      %888 = vmatprep.subr.bf16.mxu0 0
      %889 = vmatpush1.bf16.msra.mxu0 0
      %890 = vmatprep.subr.bf16.mxu0 0
      %891 = vmatpush1.bf16.msra.mxu0 0
      %892 = vmatprep.subr.bf16.mxu0 0
      %893 = vmatpush1.bf16.msra.mxu0 0
      %894 = vmatprep.subr.bf16.mxu0 0
      %895 = vmatpush1.bf16.msra.mxu0 0
      %896 = vmatprep.subr.bf16.mxu0 0
      %897 = vmatpush1.bf16.msra.mxu0 0
      %898 = vmatprep.subr.bf16.mxu0 0
      %899 = vmatpush1.bf16.msra.mxu0 0
      %900 = vmatprep.subr.bf16.mxu0 0
      %901 = vmatpush1.bf16.msra.mxu0 %v873
      %902 = vmatprep.subr.bf16.mxu0 0
      %903 = vmatpush1.bf16.msra.mxu0 %v872
      %904 = vmatprep.subr.bf16.mxu0 0
      %905 = vmatpush2.bf16.msra.mxu0 0
      %906 = vmatprep.subr.bf16.mxu0 0
      %907 = vmatpush2.bf16.msra.mxu0 0
      %908 = vmatprep.subr.bf16.mxu0 0
      %909 = vmatpush2.bf16.msra.mxu0 0
      %910 = vmatprep.subr.bf16.mxu0 0
      %911 = vmatpush2.bf16.msra.mxu0 0
      %912 = vmatprep.subr.bf16.mxu0 0
      %913 = vmatpush2.bf16.msra.mxu0 0
      %914 = vmatprep.subr.bf16.mxu0 0
      %915 = vmatpush2.bf16.msra.mxu0 0
      %916 = vmatprep.subr.bf16.mxu0 0
      %917 = vmatpush2.bf16.msra.mxu0 0
      %918 = vmatprep.subr.bf16.mxu0 0
      %919 = vmatpush2.bf16.msra.mxu0 0
      %920 = vmatprep.mubr.bf16.mxu0 0
      %921 = vmatmul.mubr.bf16.gmra.mxu0 %v877
      %v922 = vpop.f32.mrf.mxu0
      %v923 = vadd.f32 %v834, %v922
      %v924 = vpop.f32.mrf.mxu0
      %v925 = vpop.f32.mrf.mxu0
      %v926 = vadd.f32 %v837, %v925
      %v927 = vpop.f32.mrf.mxu0
      %928 = vmatprep.mubr.bf16.mxu0 0
      %929 = vmatmul.mubr.bf16.gmra.mxu0 %v880
      %v930 = vpop.f32.mrf.mxu0
      %v931 = vadd.f32 %v842, %v930
      %v932 = vpop.f32.mrf.mxu0
      %v933 = vpop.f32.mrf.mxu0
      %v934 = vadd.f32 %v845, %v933
      %v935 = vpop.f32.mrf.mxu0
      %936 = vmatprep.mubr.bf16.mxu0 0
      %937 = vmatmul.mubr.bf16.gmra.mxu0 %v883
      %v938 = vpop.f32.mrf.mxu0
      %v939 = vadd.f32 %v850, %v938
      %v940 = vpop.f32.mrf.mxu0
      %v941 = vpop.f32.mrf.mxu0
      %v942 = vadd.f32 %v853, %v941
      %v943 = vpop.f32.mrf.mxu0
      %944 = vmatprep.mubr.bf16.mxu0 0
      %945 = vmatmul.mubr.bf16.gmra.mxu0 %v886
      %v946 = vpop.f32.mrf.mxu0
      %v947 = vadd.f32 %v858, %v946
      %v948 = vpop.f32.mrf.mxu0
      %v949 = vpop.f32.mrf.mxu0
      %v950 = vadd.f32 %v861, %v949
      %v951 = vpop.f32.mrf.mxu0
      %952 = vdwg.mxu0
      %s953 = scalar_lea.vmem [#allocation2], 9
      %v954 = vld [vmem:[%s953] ss:$2 sm:$0xff]
      %s955 = scalar_lea.vmem [#allocation2], 73
      %v956 = vld [vmem:[%s955] ss:$2 sm:$0xff]
      %s957 = scalar_lea.vmem [#allocation2], 137
      %v958 = vld [vmem:[%s957] ss:$2 sm:$0xff]
      %s959 = scalar_lea.vmem [#allocation2], 201
      %v960 = vld [vmem:[%s959] ss:$2 sm:$0xff]
      %s961 = scalar_lea.vmem [#allocation2], 265
      %v962 = vld [vmem:[%s961] ss:$2 sm:$0xff]
      %s963 = scalar_lea.vmem [#allocation2], 329
      %v964 = vld [vmem:[%s963] ss:$2 sm:$0xff]
      %s965 = scalar_lea.vmem [#allocation2], 393
      %v966 = vld [vmem:[%s965] ss:$2 sm:$0xff]
      %s967 = scalar_lea.vmem [#allocation2], 457
      %v968 = vld [vmem:[%s967] ss:$2 sm:$0xff]
      %v969 = vpack.c.bf16 %v956, %v954
      %v970 = vpack.c.bf16 %v960, %v958
      %v971 = vpack.c.bf16 %v964, %v962
      %v972 = vpack.c.bf16 %v968, %v966
      %s973 = scalar_lea.vmem %s3, 32
      %v974 = vld [vmem:[%s973] sm:$0xf]
      %v975 = vld [vmem:[%s973 + $0x4] sm:$0xf]
      %v976 = vld [vmem:[%s973 + $0x8] sm:$0xf]
      %v977 = vld [vmem:[%s973 + $0xc] sm:$0xf]
      %v982 = vunpack.c.l.b16 %v974
      %v983 = vunpack.c.l.b16 %v975
      %v984 = vunpack.c.l.b16 %v976
      %v985 = vunpack.c.l.b16 %v977
      %v986 = vpack.c.b16 %v983, %v982
      %v987 = vpack.c.b16 %v985, %v984
      %v991 = vsel %vm619, %v969, 0
      %v994 = vsel %vm619, %v970, 0
      %v997 = vsel %vm619, %v971, 0
      %v1000 = vsel %vm619, %v972, 0
      %1002 = vmatprep.subr.bf16.mxu0 0
      %1003 = vmatpush1.bf16.msra.mxu0 0
      %1004 = vmatprep.subr.bf16.mxu0 0
      %1005 = vmatpush1.bf16.msra.mxu0 0
      %1006 = vmatprep.subr.bf16.mxu0 0
      %1007 = vmatpush1.bf16.msra.mxu0 0
      %1008 = vmatprep.subr.bf16.mxu0 0
      %1009 = vmatpush1.bf16.msra.mxu0 0
      %1010 = vmatprep.subr.bf16.mxu0 0
      %1011 = vmatpush1.bf16.msra.mxu0 0
      %1012 = vmatprep.subr.bf16.mxu0 0
      %1013 = vmatpush1.bf16.msra.mxu0 0
      %1014 = vmatprep.subr.bf16.mxu0 0
      %1015 = vmatpush1.bf16.msra.mxu0 %v987
      %1016 = vmatprep.subr.bf16.mxu0 0
      %1017 = vmatpush1.bf16.msra.mxu0 %v986
      %1018 = vmatprep.subr.bf16.mxu0 0
      %1019 = vmatpush2.bf16.msra.mxu0 0
      %1020 = vmatprep.subr.bf16.mxu0 0
      %1021 = vmatpush2.bf16.msra.mxu0 0
      %1022 = vmatprep.subr.bf16.mxu0 0
      %1023 = vmatpush2.bf16.msra.mxu0 0
      %1024 = vmatprep.subr.bf16.mxu0 0
      %1025 = vmatpush2.bf16.msra.mxu0 0
      %1026 = vmatprep.subr.bf16.mxu0 0
      %1027 = vmatpush2.bf16.msra.mxu0 0
      %1028 = vmatprep.subr.bf16.mxu0 0
      %1029 = vmatpush2.bf16.msra.mxu0 0
      %1030 = vmatprep.subr.bf16.mxu0 0
      %1031 = vmatpush2.bf16.msra.mxu0 0
      %1032 = vmatprep.subr.bf16.mxu0 0
      %1033 = vmatpush2.bf16.msra.mxu0 0
      %1034 = vmatprep.mubr.bf16.mxu0 0
      %1035 = vmatmul.mubr.bf16.gmra.mxu0 %v991
      %v1036 = vpop.f32.mrf.mxu0
      %v1037 = vadd.f32 0.0, %v1036
      %v1038 = vpop.f32.mrf.mxu0
      %v1039 = vpop.f32.mrf.mxu0
      %v1040 = vadd.f32 0.0, %v1039
      %v1041 = vpop.f32.mrf.mxu0
      %1042 = vmatprep.mubr.bf16.mxu0 0
      %1043 = vmatmul.mubr.bf16.gmra.mxu0 %v994
      %v1044 = vpop.f32.mrf.mxu0
      %v1045 = vadd.f32 0.0, %v1044
      %v1046 = vpop.f32.mrf.mxu0
      %v1047 = vpop.f32.mrf.mxu0
      %v1048 = vadd.f32 0.0, %v1047
      %v1049 = vpop.f32.mrf.mxu0
      %1050 = vmatprep.mubr.bf16.mxu0 0
      %1051 = vmatmul.mubr.bf16.gmra.mxu0 %v997
      %v1052 = vpop.f32.mrf.mxu0
      %v1053 = vadd.f32 0.0, %v1052
      %v1054 = vpop.f32.mrf.mxu0
      %v1055 = vpop.f32.mrf.mxu0
      %v1056 = vadd.f32 0.0, %v1055
      %v1057 = vpop.f32.mrf.mxu0
      %1058 = vmatprep.mubr.bf16.mxu0 0
      %1059 = vmatmul.mubr.bf16.gmra.mxu0 %v1000
      %v1060 = vpop.f32.mrf.mxu0
      %v1061 = vadd.f32 0.0, %v1060
      %v1062 = vpop.f32.mrf.mxu0
      %v1063 = vpop.f32.mrf.mxu0
      %v1064 = vadd.f32 0.0, %v1063
      %v1065 = vpop.f32.mrf.mxu0
      %1066 = vdwg.mxu0
      %v1067 = vadd.f32 %v923, %v1037
      %v1068 = vadd.f32 %v926, %v1040
      %v1069 = vadd.f32 %v931, %v1045
      %v1070 = vadd.f32 %v934, %v1048
      %v1071 = vadd.f32 %v939, %v1053
      %v1072 = vadd.f32 %v942, %v1056
      %v1073 = vadd.f32 %v947, %v1061
      %v1074 = vadd.f32 %v950, %v1064
      %s1075 = scalar_lea.vmem %s693, 7 [#allocation2]
      %v1076 = vld [vmem:[%s1075] ss:$2 sm:$0xff]
      %s1077 = scalar_lea.vmem %s693, 71 [#allocation2]
      %v1078 = vld [vmem:[%s1077] ss:$2 sm:$0xff]
      %s1079 = scalar_lea.vmem %s693, 135 [#allocation2]
      %v1080 = vld [vmem:[%s1079] ss:$2 sm:$0xff]
      %s1081 = scalar_lea.vmem %s693, 199 [#allocation2]
      %v1082 = vld [vmem:[%s1081] ss:$2 sm:$0xff]
      %s1083 = scalar_lea.vmem %s693, 263 [#allocation2]
      %v1084 = vld [vmem:[%s1083] ss:$2 sm:$0xff]
      %s1085 = scalar_lea.vmem %s693, 327 [#allocation2]
      %v1086 = vld [vmem:[%s1085] ss:$2 sm:$0xff]
      %s1087 = scalar_lea.vmem %s693, 391 [#allocation2]
      %v1088 = vld [vmem:[%s1087] ss:$2 sm:$0xff]
      %s1089 = scalar_lea.vmem %s693, 455 [#allocation2]
      %v1090 = vld [vmem:[%s1089] ss:$2 sm:$0xff]
      %v1091 = vpack.c.bf16 %v1078, %v1076
      %v1092 = vpack.c.bf16 %v1082, %v1080
      %v1093 = vpack.c.bf16 %v1086, %v1084
      %v1094 = vpack.c.bf16 %v1090, %v1088
      %s1095 = scalar_lea.vmem %s3, 48
      %v1096 = vld [vmem:[%s1095] sm:$0xf]
      %v1097 = vld [vmem:[%s1095 + $0x4] sm:$0xf]
      %v1098 = vld [vmem:[%s1095 + $0x8] sm:$0xf]
      %v1099 = vld [vmem:[%s1095 + $0xc] sm:$0xf]
      %v1104 = vunpack.c.l.b16 %v1096
      %v1105 = vunpack.c.l.b16 %v1097
      %v1106 = vunpack.c.l.b16 %v1098
      %v1107 = vunpack.c.l.b16 %v1099
      %v1108 = vpack.c.b16 %v1105, %v1104
      %v1109 = vpack.c.b16 %v1107, %v1106
      %v1113 = vsel %vm619, %v1091, 0
      %v1116 = vsel %vm619, %v1092, 0
      %v1119 = vsel %vm619, %v1093, 0
      %v1122 = vsel %vm619, %v1094, 0
      %1124 = vmatprep.subr.bf16.mxu0 0
      %1125 = vmatpush1.bf16.msra.mxu0 0
      %1126 = vmatprep.subr.bf16.mxu0 0
      %1127 = vmatpush1.bf16.msra.mxu0 0
      %1128 = vmatprep.subr.bf16.mxu0 0
      %1129 = vmatpush1.bf16.msra.mxu0 0
      %1130 = vmatprep.subr.bf16.mxu0 0
      %1131 = vmatpush1.bf16.msra.mxu0 0
      %1132 = vmatprep.subr.bf16.mxu0 0
      %1133 = vmatpush1.bf16.msra.mxu0 0
      %1134 = vmatprep.subr.bf16.mxu0 0
      %1135 = vmatpush1.bf16.msra.mxu0 0
      %1136 = vmatprep.subr.bf16.mxu0 0
      %1137 = vmatpush1.bf16.msra.mxu0 %v1109
      %1138 = vmatprep.subr.bf16.mxu0 0
      %1139 = vmatpush1.bf16.msra.mxu0 %v1108
      %1140 = vmatprep.subr.bf16.mxu0 0
      %1141 = vmatpush2.bf16.msra.mxu0 0
      %1142 = vmatprep.subr.bf16.mxu0 0
      %1143 = vmatpush2.bf16.msra.mxu0 0
      %1144 = vmatprep.subr.bf16.mxu0 0
      %1145 = vmatpush2.bf16.msra.mxu0 0
      %1146 = vmatprep.subr.bf16.mxu0 0
      %1147 = vmatpush2.bf16.msra.mxu0 0
      %1148 = vmatprep.subr.bf16.mxu0 0
      %1149 = vmatpush2.bf16.msra.mxu0 0
      %1150 = vmatprep.subr.bf16.mxu0 0
      %1151 = vmatpush2.bf16.msra.mxu0 0
      %1152 = vmatprep.subr.bf16.mxu0 0
      %1153 = vmatpush2.bf16.msra.mxu0 0
      %1154 = vmatprep.subr.bf16.mxu0 0
      %1155 = vmatpush2.bf16.msra.mxu0 0
      %1156 = vmatprep.mubr.bf16.mxu0 0
      %1157 = vmatmul.mubr.bf16.gmra.mxu0 %v1113
      %v1158 = vpop.f32.mrf.mxu0
      %v1159 = vadd.f32 0.0, %v1158
      %v1160 = vpop.f32.mrf.mxu0
      %v1161 = vpop.f32.mrf.mxu0
      %v1162 = vadd.f32 0.0, %v1161
      %v1163 = vpop.f32.mrf.mxu0
      %1164 = vmatprep.mubr.bf16.mxu0 0
      %1165 = vmatmul.mubr.bf16.gmra.mxu0 %v1116
      %v1166 = vpop.f32.mrf.mxu0
      %v1167 = vadd.f32 0.0, %v1166
      %v1168 = vpop.f32.mrf.mxu0
      %v1169 = vpop.f32.mrf.mxu0
      %v1170 = vadd.f32 0.0, %v1169
      %v1171 = vpop.f32.mrf.mxu0
      %1172 = vmatprep.mubr.bf16.mxu0 0
      %1173 = vmatmul.mubr.bf16.gmra.mxu0 %v1119
      %v1174 = vpop.f32.mrf.mxu0
      %v1175 = vadd.f32 0.0, %v1174
      %v1176 = vpop.f32.mrf.mxu0
      %v1177 = vpop.f32.mrf.mxu0
      %v1178 = vadd.f32 0.0, %v1177
      %v1179 = vpop.f32.mrf.mxu0
      %1180 = vmatprep.mubr.bf16.mxu0 0
      %1181 = vmatmul.mubr.bf16.gmra.mxu0 %v1122
      %v1182 = vpop.f32.mrf.mxu0
      %v1183 = vadd.f32 0.0, %v1182
      %v1184 = vpop.f32.mrf.mxu0
      %v1185 = vpop.f32.mrf.mxu0
      %v1186 = vadd.f32 0.0, %v1185
      %v1187 = vpop.f32.mrf.mxu0
      %1188 = vdwg.mxu0
      %v1189 = vadd.f32 %v1067, %v1159
      %v1190 = vadd.f32 %v1068, %v1162
      %v1191 = vadd.f32 %v1069, %v1167
      %v1192 = vadd.f32 %v1070, %v1170
      %v1193 = vadd.f32 %v1071, %v1175
      %v1194 = vadd.f32 %v1072, %v1178
      %v1195 = vadd.f32 %v1073, %v1183
      %v1196 = vadd.f32 %v1074, %v1186
      %s1197 = scalar_lea.vmem %s693, 8 [#allocation2]
      %v1198 = vld [vmem:[%s1197] ss:$2 sm:$0xff]
      %s1199 = scalar_lea.vmem %s693, 72 [#allocation2]
      %v1200 = vld [vmem:[%s1199] ss:$2 sm:$0xff]
      %s1201 = scalar_lea.vmem %s693, 136 [#allocation2]
      %v1202 = vld [vmem:[%s1201] ss:$2 sm:$0xff]
      %s1203 = scalar_lea.vmem %s693, 200 [#allocation2]
      %v1204 = vld [vmem:[%s1203] ss:$2 sm:$0xff]
      %s1205 = scalar_lea.vmem %s693, 264 [#allocation2]
      %v1206 = vld [vmem:[%s1205] ss:$2 sm:$0xff]
      %s1207 = scalar_lea.vmem %s693, 328 [#allocation2]
      %v1208 = vld [vmem:[%s1207] ss:$2 sm:$0xff]
      %s1209 = scalar_lea.vmem %s693, 392 [#allocation2]
      %v1210 = vld [vmem:[%s1209] ss:$2 sm:$0xff]
      %s1211 = scalar_lea.vmem %s693, 456 [#allocation2]
      %v1212 = vld [vmem:[%s1211] ss:$2 sm:$0xff]
      %v1213 = vpack.c.bf16 %v1200, %v1198
      %v1214 = vpack.c.bf16 %v1204, %v1202
      %v1215 = vpack.c.bf16 %v1208, %v1206
      %v1216 = vpack.c.bf16 %v1212, %v1210
      %s1217 = scalar_lea.vmem %s3, 64
      %v1218 = vld [vmem:[%s1217] sm:$0xf]
      %v1219 = vld [vmem:[%s1217 + $0x4] sm:$0xf]
      %v1220 = vld [vmem:[%s1217 + $0x8] sm:$0xf]
      %v1221 = vld [vmem:[%s1217 + $0xc] sm:$0xf]
      %v1226 = vunpack.c.l.b16 %v1218
      %v1227 = vunpack.c.l.b16 %v1219
      %v1228 = vunpack.c.l.b16 %v1220
      %v1229 = vunpack.c.l.b16 %v1221
      %v1230 = vpack.c.b16 %v1227, %v1226
      %v1231 = vpack.c.b16 %v1229, %v1228
      %v1235 = vsel %vm619, %v1213, 0
      %v1238 = vsel %vm619, %v1214, 0
      %v1241 = vsel %vm619, %v1215, 0
      %v1244 = vsel %vm619, %v1216, 0
      %1246 = vmatprep.subr.bf16.mxu0 0
      %1247 = vmatpush1.bf16.msra.mxu0 0
      %1248 = vmatprep.subr.bf16.mxu0 0
      %1249 = vmatpush1.bf16.msra.mxu0 0
      %1250 = vmatprep.subr.bf16.mxu0 0
      %1251 = vmatpush1.bf16.msra.mxu0 0
      %1252 = vmatprep.subr.bf16.mxu0 0
      %1253 = vmatpush1.bf16.msra.mxu0 0
      %1254 = vmatprep.subr.bf16.mxu0 0
      %1255 = vmatpush1.bf16.msra.mxu0 0
      %1256 = vmatprep.subr.bf16.mxu0 0
      %1257 = vmatpush1.bf16.msra.mxu0 0
      %1258 = vmatprep.subr.bf16.mxu0 0
      %1259 = vmatpush1.bf16.msra.mxu0 %v1231
      %1260 = vmatprep.subr.bf16.mxu0 0
      %1261 = vmatpush1.bf16.msra.mxu0 %v1230
      %1262 = vmatprep.subr.bf16.mxu0 0
      %1263 = vmatpush2.bf16.msra.mxu0 0
      %1264 = vmatprep.subr.bf16.mxu0 0
      %1265 = vmatpush2.bf16.msra.mxu0 0
      %1266 = vmatprep.subr.bf16.mxu0 0
      %1267 = vmatpush2.bf16.msra.mxu0 0
      %1268 = vmatprep.subr.bf16.mxu0 0
      %1269 = vmatpush2.bf16.msra.mxu0 0
      %1270 = vmatprep.subr.bf16.mxu0 0
      %1271 = vmatpush2.bf16.msra.mxu0 0
      %1272 = vmatprep.subr.bf16.mxu0 0
      %1273 = vmatpush2.bf16.msra.mxu0 0
      %1274 = vmatprep.subr.bf16.mxu0 0
      %1275 = vmatpush2.bf16.msra.mxu0 0
      %1276 = vmatprep.subr.bf16.mxu0 0
      %1277 = vmatpush2.bf16.msra.mxu0 0
      %1278 = vmatprep.mubr.bf16.mxu0 0
      %1279 = vmatmul.mubr.bf16.gmra.mxu0 %v1235
      %v1280 = vpop.f32.mrf.mxu0
      %v1281 = vadd.f32 0.0, %v1280
      %v1282 = vpop.f32.mrf.mxu0
      %v1283 = vpop.f32.mrf.mxu0
      %v1284 = vadd.f32 0.0, %v1283
      %v1285 = vpop.f32.mrf.mxu0
      %1286 = vmatprep.mubr.bf16.mxu0 0
      %1287 = vmatmul.mubr.bf16.gmra.mxu0 %v1238
      %v1288 = vpop.f32.mrf.mxu0
      %v1289 = vadd.f32 0.0, %v1288
      %v1290 = vpop.f32.mrf.mxu0
      %v1291 = vpop.f32.mrf.mxu0
      %v1292 = vadd.f32 0.0, %v1291
      %v1293 = vpop.f32.mrf.mxu0
      %1294 = vmatprep.mubr.bf16.mxu0 0
      %1295 = vmatmul.mubr.bf16.gmra.mxu0 %v1241
      %v1296 = vpop.f32.mrf.mxu0
      %v1297 = vadd.f32 0.0, %v1296
      %v1298 = vpop.f32.mrf.mxu0
      %v1299 = vpop.f32.mrf.mxu0
      %v1300 = vadd.f32 0.0, %v1299
      %v1301 = vpop.f32.mrf.mxu0
      %1302 = vmatprep.mubr.bf16.mxu0 0
      %1303 = vmatmul.mubr.bf16.gmra.mxu0 %v1244
      %v1304 = vpop.f32.mrf.mxu0
      %v1305 = vadd.f32 0.0, %v1304
      %v1306 = vpop.f32.mrf.mxu0
      %v1307 = vpop.f32.mrf.mxu0
      %v1308 = vadd.f32 0.0, %v1307
      %v1309 = vpop.f32.mrf.mxu0
      %1310 = vdwg.mxu0
      %v1311 = vadd.f32 %v1189, %v1281
      %v1312 = vadd.f32 %v1190, %v1284
      %v1313 = vadd.f32 %v1191, %v1289
      %v1314 = vadd.f32 %v1192, %v1292
      %v1315 = vadd.f32 %v1193, %v1297
      %v1316 = vadd.f32 %v1194, %v1300
      %v1317 = vadd.f32 %v1195, %v1305
      %v1318 = vadd.f32 %v1196, %v1308
      %s1319 = scalar_lea.vmem %s693, 9 [#allocation2]
      %v1320 = vld [vmem:[%s1319] ss:$2 sm:$0xff]
      %s1321 = scalar_lea.vmem %s693, 73 [#allocation2]
      %v1322 = vld [vmem:[%s1321] ss:$2 sm:$0xff]
      %s1323 = scalar_lea.vmem %s693, 137 [#allocation2]
      %v1324 = vld [vmem:[%s1323] ss:$2 sm:$0xff]
      %s1325 = scalar_lea.vmem %s693, 201 [#allocation2]
      %v1326 = vld [vmem:[%s1325] ss:$2 sm:$0xff]
      %s1327 = scalar_lea.vmem %s693, 265 [#allocation2]
      %v1328 = vld [vmem:[%s1327] ss:$2 sm:$0xff]
      %s1329 = scalar_lea.vmem %s693, 329 [#allocation2]
      %v1330 = vld [vmem:[%s1329] ss:$2 sm:$0xff]
      %s1331 = scalar_lea.vmem %s693, 393 [#allocation2]
      %v1332 = vld [vmem:[%s1331] ss:$2 sm:$0xff]
      %s1333 = scalar_lea.vmem %s693, 457 [#allocation2]
      %v1334 = vld [vmem:[%s1333] ss:$2 sm:$0xff]
      %v1335 = vpack.c.bf16 %v1322, %v1320
      %v1336 = vpack.c.bf16 %v1326, %v1324
      %v1337 = vpack.c.bf16 %v1330, %v1328
      %v1338 = vpack.c.bf16 %v1334, %v1332
      %s1339 = scalar_lea.vmem %s3, 80
      %v1340 = vld [vmem:[%s1339] sm:$0xf]
      %v1341 = vld [vmem:[%s1339 + $0x4] sm:$0xf]
      %v1342 = vld [vmem:[%s1339 + $0x8] sm:$0xf]
      %v1343 = vld [vmem:[%s1339 + $0xc] sm:$0xf]
      %v1348 = vunpack.c.l.b16 %v1340
      %v1349 = vunpack.c.l.b16 %v1341
      %v1350 = vunpack.c.l.b16 %v1342
      %v1351 = vunpack.c.l.b16 %v1343
      %v1352 = vpack.c.b16 %v1349, %v1348
      %v1353 = vpack.c.b16 %v1351, %v1350
      %v1357 = vsel %vm619, %v1335, 0
      %v1360 = vsel %vm619, %v1336, 0
      %v1363 = vsel %vm619, %v1337, 0
      %v1366 = vsel %vm619, %v1338, 0
      %1368 = vmatprep.subr.bf16.mxu0 0
      %1369 = vmatpush1.bf16.msra.mxu0 0
      %1370 = vmatprep.subr.bf16.mxu0 0
      %1371 = vmatpush1.bf16.msra.mxu0 0
      %1372 = vmatprep.subr.bf16.mxu0 0
      %1373 = vmatpush1.bf16.msra.mxu0 0
      %1374 = vmatprep.subr.bf16.mxu0 0
      %1375 = vmatpush1.bf16.msra.mxu0 0
      %1376 = vmatprep.subr.bf16.mxu0 0
      %1377 = vmatpush1.bf16.msra.mxu0 0
      %1378 = vmatprep.subr.bf16.mxu0 0
      %1379 = vmatpush1.bf16.msra.mxu0 0
      %1380 = vmatprep.subr.bf16.mxu0 0
      %1381 = vmatpush1.bf16.msra.mxu0 %v1353
      %1382 = vmatprep.subr.bf16.mxu0 0
      %1383 = vmatpush1.bf16.msra.mxu0 %v1352
      %1384 = vmatprep.subr.bf16.mxu0 0
      %1385 = vmatpush2.bf16.msra.mxu0 0
      %1386 = vmatprep.subr.bf16.mxu0 0
      %1387 = vmatpush2.bf16.msra.mxu0 0
      %1388 = vmatprep.subr.bf16.mxu0 0
      %1389 = vmatpush2.bf16.msra.mxu0 0
      %1390 = vmatprep.subr.bf16.mxu0 0
      %1391 = vmatpush2.bf16.msra.mxu0 0
      %1392 = vmatprep.subr.bf16.mxu0 0
      %1393 = vmatpush2.bf16.msra.mxu0 0
      %1394 = vmatprep.subr.bf16.mxu0 0
      %1395 = vmatpush2.bf16.msra.mxu0 0
      %1396 = vmatprep.subr.bf16.mxu0 0
      %1397 = vmatpush2.bf16.msra.mxu0 0
      %1398 = vmatprep.subr.bf16.mxu0 0
      %1399 = vmatpush2.bf16.msra.mxu0 0
      %1400 = vmatprep.mubr.bf16.mxu0 0
      %1401 = vmatmul.mubr.bf16.gmra.mxu0 %v1357
      %v1402 = vpop.f32.mrf.mxu0
      %v1403 = vadd.f32 0.0, %v1402
      %v1404 = vpop.f32.mrf.mxu0
      %v1405 = vpop.f32.mrf.mxu0
      %v1406 = vadd.f32 0.0, %v1405
      %v1407 = vpop.f32.mrf.mxu0
      %1408 = vmatprep.mubr.bf16.mxu0 0
      %1409 = vmatmul.mubr.bf16.gmra.mxu0 %v1360
      %v1410 = vpop.f32.mrf.mxu0
      %v1411 = vadd.f32 0.0, %v1410
      %v1412 = vpop.f32.mrf.mxu0
      %v1413 = vpop.f32.mrf.mxu0
      %v1414 = vadd.f32 0.0, %v1413
      %v1415 = vpop.f32.mrf.mxu0
      %1416 = vmatprep.mubr.bf16.mxu0 0
      %1417 = vmatmul.mubr.bf16.gmra.mxu0 %v1363
      %v1418 = vpop.f32.mrf.mxu0
      %v1419 = vadd.f32 0.0, %v1418
      %v1420 = vpop.f32.mrf.mxu0
      %v1421 = vpop.f32.mrf.mxu0
      %v1422 = vadd.f32 0.0, %v1421
      %v1423 = vpop.f32.mrf.mxu0
      %1424 = vmatprep.mubr.bf16.mxu0 0
      %1425 = vmatmul.mubr.bf16.gmra.mxu0 %v1366
      %v1426 = vpop.f32.mrf.mxu0
      %v1427 = vadd.f32 0.0, %v1426
      %v1428 = vpop.f32.mrf.mxu0
      %v1429 = vpop.f32.mrf.mxu0
      %v1430 = vadd.f32 0.0, %v1429
      %v1431 = vpop.f32.mrf.mxu0
      %1432 = vdwg.mxu0
      %v1433 = vadd.f32 %v1311, %v1403
      %v1434 = vadd.f32 %v1312, %v1406
      %v1435 = vadd.f32 %v1313, %v1411
      %v1436 = vadd.f32 %v1314, %v1414
      %v1437 = vadd.f32 %v1315, %v1419
      %v1438 = vadd.f32 %v1316, %v1422
      %v1439 = vadd.f32 %v1317, %v1427
      %v1440 = vadd.f32 %v1318, %v1430
      %s1441 = scalar_lea.vmem [#allocation2], 64
      %s1442 = scalar_lea.vmem %s1441, 7 [#allocation2]
      %v1443 = vld [vmem:[%s1442] ss:$2 sm:$0xff]
      %s1444 = scalar_lea.vmem %s1441, 71 [#allocation2]
      %v1445 = vld [vmem:[%s1444] ss:$2 sm:$0xff]
      %s1446 = scalar_lea.vmem %s1441, 135 [#allocation2]
      %v1447 = vld [vmem:[%s1446] ss:$2 sm:$0xff]
      %s1448 = scalar_lea.vmem %s1441, 199 [#allocation2]
      %v1449 = vld [vmem:[%s1448] ss:$2 sm:$0xff]
      %s1450 = scalar_lea.vmem %s1441, 263 [#allocation2]
      %v1451 = vld [vmem:[%s1450] ss:$2 sm:$0xff]
      %s1452 = scalar_lea.vmem %s1441, 327 [#allocation2]
      %v1453 = vld [vmem:[%s1452] ss:$2 sm:$0xff]
      %s1454 = scalar_lea.vmem %s1441, 391 [#allocation2]
      %v1455 = vld [vmem:[%s1454] ss:$2 sm:$0xff]
      %s1456 = scalar_lea.vmem %s1441, 455 [#allocation2]
      %v1457 = vld [vmem:[%s1456] ss:$2 sm:$0xff]
      %v1458 = vpack.c.bf16 %v1445, %v1443
      %v1459 = vpack.c.bf16 %v1449, %v1447
      %v1460 = vpack.c.bf16 %v1453, %v1451
      %v1461 = vpack.c.bf16 %v1457, %v1455
      %s1462 = scalar_lea.vmem %s3, 96
      %v1463 = vld [vmem:[%s1462] sm:$0xf]
      %v1464 = vld [vmem:[%s1462 + $0x4] sm:$0xf]
      %v1465 = vld [vmem:[%s1462 + $0x8] sm:$0xf]
      %v1466 = vld [vmem:[%s1462 + $0xc] sm:$0xf]
      %v1471 = vunpack.c.l.b16 %v1463
      %v1472 = vunpack.c.l.b16 %v1464
      %v1473 = vunpack.c.l.b16 %v1465
      %v1474 = vunpack.c.l.b16 %v1466
      %v1475 = vpack.c.b16 %v1472, %v1471
      %v1476 = vpack.c.b16 %v1474, %v1473
      %v1480 = vsel %vm619, %v1458, 0
      %v1483 = vsel %vm619, %v1459, 0
      %v1486 = vsel %vm619, %v1460, 0
      %v1489 = vsel %vm619, %v1461, 0
      %1491 = vmatprep.subr.bf16.mxu0 0
      %1492 = vmatpush1.bf16.msra.mxu0 0
      %1493 = vmatprep.subr.bf16.mxu0 0
      %1494 = vmatpush1.bf16.msra.mxu0 0
      %1495 = vmatprep.subr.bf16.mxu0 0
      %1496 = vmatpush1.bf16.msra.mxu0 0
      %1497 = vmatprep.subr.bf16.mxu0 0
      %1498 = vmatpush1.bf16.msra.mxu0 0
      %1499 = vmatprep.subr.bf16.mxu0 0
      %1500 = vmatpush1.bf16.msra.mxu0 0
      %1501 = vmatprep.subr.bf16.mxu0 0
      %1502 = vmatpush1.bf16.msra.mxu0 0
      %1503 = vmatprep.subr.bf16.mxu0 0
      %1504 = vmatpush1.bf16.msra.mxu0 %v1476
      %1505 = vmatprep.subr.bf16.mxu0 0
      %1506 = vmatpush1.bf16.msra.mxu0 %v1475
      %1507 = vmatprep.subr.bf16.mxu0 0
      %1508 = vmatpush2.bf16.msra.mxu0 0
      %1509 = vmatprep.subr.bf16.mxu0 0
      %1510 = vmatpush2.bf16.msra.mxu0 0
      %1511 = vmatprep.subr.bf16.mxu0 0
      %1512 = vmatpush2.bf16.msra.mxu0 0
      %1513 = vmatprep.subr.bf16.mxu0 0
      %1514 = vmatpush2.bf16.msra.mxu0 0
      %1515 = vmatprep.subr.bf16.mxu0 0
      %1516 = vmatpush2.bf16.msra.mxu0 0
      %1517 = vmatprep.subr.bf16.mxu0 0
      %1518 = vmatpush2.bf16.msra.mxu0 0
      %1519 = vmatprep.subr.bf16.mxu0 0
      %1520 = vmatpush2.bf16.msra.mxu0 0
      %1521 = vmatprep.subr.bf16.mxu0 0
      %1522 = vmatpush2.bf16.msra.mxu0 0
      %1523 = vmatprep.mubr.bf16.mxu0 0
      %1524 = vmatmul.mubr.bf16.gmra.mxu0 %v1480
      %v1525 = vpop.f32.mrf.mxu0
      %v1526 = vadd.f32 0.0, %v1525
      %v1527 = vpop.f32.mrf.mxu0
      %v1528 = vpop.f32.mrf.mxu0
      %v1529 = vadd.f32 0.0, %v1528
      %v1530 = vpop.f32.mrf.mxu0
      %1531 = vmatprep.mubr.bf16.mxu0 0
      %1532 = vmatmul.mubr.bf16.gmra.mxu0 %v1483
      %v1533 = vpop.f32.mrf.mxu0
      %v1534 = vadd.f32 0.0, %v1533
      %v1535 = vpop.f32.mrf.mxu0
      %v1536 = vpop.f32.mrf.mxu0
      %v1537 = vadd.f32 0.0, %v1536
      %v1538 = vpop.f32.mrf.mxu0
      %1539 = vmatprep.mubr.bf16.mxu0 0
      %1540 = vmatmul.mubr.bf16.gmra.mxu0 %v1486
      %v1541 = vpop.f32.mrf.mxu0
      %v1542 = vadd.f32 0.0, %v1541
      %v1543 = vpop.f32.mrf.mxu0
      %v1544 = vpop.f32.mrf.mxu0
      %v1545 = vadd.f32 0.0, %v1544
      %v1546 = vpop.f32.mrf.mxu0
      %1547 = vmatprep.mubr.bf16.mxu0 0
      %1548 = vmatmul.mubr.bf16.gmra.mxu0 %v1489
      %v1549 = vpop.f32.mrf.mxu0
      %v1550 = vadd.f32 0.0, %v1549
      %v1551 = vpop.f32.mrf.mxu0
      %v1552 = vpop.f32.mrf.mxu0
      %v1553 = vadd.f32 0.0, %v1552
      %v1554 = vpop.f32.mrf.mxu0
      %1555 = vdwg.mxu0
      %v1556 = vadd.f32 %v1433, %v1526
      %v1557 = vadd.f32 %v1434, %v1529
      %v1558 = vadd.f32 %v1435, %v1534
      %v1559 = vadd.f32 %v1436, %v1537
      %v1560 = vadd.f32 %v1437, %v1542
      %v1561 = vadd.f32 %v1438, %v1545
      %v1562 = vadd.f32 %v1439, %v1550
      %v1563 = vadd.f32 %v1440, %v1553
      %s1564 = scalar_lea.vmem %s1441, 8 [#allocation2]
      %v1565 = vld [vmem:[%s1564] ss:$2 sm:$0xff]
      %s1566 = scalar_lea.vmem %s1441, 72 [#allocation2]
      %v1567 = vld [vmem:[%s1566] ss:$2 sm:$0xff]
      %s1568 = scalar_lea.vmem %s1441, 136 [#allocation2]
      %v1569 = vld [vmem:[%s1568] ss:$2 sm:$0xff]
      %s1570 = scalar_lea.vmem %s1441, 200 [#allocation2]
      %v1571 = vld [vmem:[%s1570] ss:$2 sm:$0xff]
      %s1572 = scalar_lea.vmem %s1441, 264 [#allocation2]
      %v1573 = vld [vmem:[%s1572] ss:$2 sm:$0xff]
      %s1574 = scalar_lea.vmem %s1441, 328 [#allocation2]
      %v1575 = vld [vmem:[%s1574] ss:$2 sm:$0xff]
      %s1576 = scalar_lea.vmem %s1441, 392 [#allocation2]
      %v1577 = vld [vmem:[%s1576] ss:$2 sm:$0xff]
      %s1578 = scalar_lea.vmem %s1441, 456 [#allocation2]
      %v1579 = vld [vmem:[%s1578] ss:$2 sm:$0xff]
      %v1580 = vpack.c.bf16 %v1567, %v1565
      %v1581 = vpack.c.bf16 %v1571, %v1569
      %v1582 = vpack.c.bf16 %v1575, %v1573
      %v1583 = vpack.c.bf16 %v1579, %v1577
      %s1584 = scalar_lea.vmem %s3, 112
      %v1585 = vld [vmem:[%s1584] sm:$0xf]
      %v1586 = vld [vmem:[%s1584 + $0x4] sm:$0xf]
      %v1587 = vld [vmem:[%s1584 + $0x8] sm:$0xf]
      %v1588 = vld [vmem:[%s1584 + $0xc] sm:$0xf]
      %v1593 = vunpack.c.l.b16 %v1585
      %v1594 = vunpack.c.l.b16 %v1586
      %v1595 = vunpack.c.l.b16 %v1587
      %v1596 = vunpack.c.l.b16 %v1588
      %v1597 = vpack.c.b16 %v1594, %v1593
      %v1598 = vpack.c.b16 %v1596, %v1595
      %v1602 = vsel %vm619, %v1580, 0
      %v1605 = vsel %vm619, %v1581, 0
      %v1608 = vsel %vm619, %v1582, 0
      %v1611 = vsel %vm619, %v1583, 0
      %1613 = vmatprep.subr.bf16.mxu0 0
      %1614 = vmatpush1.bf16.msra.mxu0 0
      %1615 = vmatprep.subr.bf16.mxu0 0
      %1616 = vmatpush1.bf16.msra.mxu0 0
      %1617 = vmatprep.subr.bf16.mxu0 0
      %1618 = vmatpush1.bf16.msra.mxu0 0
      %1619 = vmatprep.subr.bf16.mxu0 0
      %1620 = vmatpush1.bf16.msra.mxu0 0
      %1621 = vmatprep.subr.bf16.mxu0 0
      %1622 = vmatpush1.bf16.msra.mxu0 0
      %1623 = vmatprep.subr.bf16.mxu0 0
      %1624 = vmatpush1.bf16.msra.mxu0 0
      %1625 = vmatprep.subr.bf16.mxu0 0
      %1626 = vmatpush1.bf16.msra.mxu0 %v1598
      %1627 = vmatprep.subr.bf16.mxu0 0
      %1628 = vmatpush1.bf16.msra.mxu0 %v1597
      %1629 = vmatprep.subr.bf16.mxu0 0
      %1630 = vmatpush2.bf16.msra.mxu0 0
      %1631 = vmatprep.subr.bf16.mxu0 0
      %1632 = vmatpush2.bf16.msra.mxu0 0
      %1633 = vmatprep.subr.bf16.mxu0 0
      %1634 = vmatpush2.bf16.msra.mxu0 0
      %1635 = vmatprep.subr.bf16.mxu0 0
      %1636 = vmatpush2.bf16.msra.mxu0 0
      %1637 = vmatprep.subr.bf16.mxu0 0
      %1638 = vmatpush2.bf16.msra.mxu0 0
      %1639 = vmatprep.subr.bf16.mxu0 0
      %1640 = vmatpush2.bf16.msra.mxu0 0
      %1641 = vmatprep.subr.bf16.mxu0 0
      %1642 = vmatpush2.bf16.msra.mxu0 0
      %1643 = vmatprep.subr.bf16.mxu0 0
      %1644 = vmatpush2.bf16.msra.mxu0 0
      %1645 = vmatprep.mubr.bf16.mxu0 0
      %1646 = vmatmul.mubr.bf16.gmra.mxu0 %v1602
      %v1647 = vpop.f32.mrf.mxu0
      %v1648 = vadd.f32 0.0, %v1647
      %v1649 = vpop.f32.mrf.mxu0
      %v1650 = vpop.f32.mrf.mxu0
      %v1651 = vadd.f32 0.0, %v1650
      %v1652 = vpop.f32.mrf.mxu0
      %1653 = vmatprep.mubr.bf16.mxu0 0
      %1654 = vmatmul.mubr.bf16.gmra.mxu0 %v1605
      %v1655 = vpop.f32.mrf.mxu0
      %v1656 = vadd.f32 0.0, %v1655
      %v1657 = vpop.f32.mrf.mxu0
      %v1658 = vpop.f32.mrf.mxu0
      %v1659 = vadd.f32 0.0, %v1658
      %v1660 = vpop.f32.mrf.mxu0
      %1661 = vmatprep.mubr.bf16.mxu0 0
      %1662 = vmatmul.mubr.bf16.gmra.mxu0 %v1608
      %v1663 = vpop.f32.mrf.mxu0
      %v1664 = vadd.f32 0.0, %v1663
      %v1665 = vpop.f32.mrf.mxu0
      %v1666 = vpop.f32.mrf.mxu0
      %v1667 = vadd.f32 0.0, %v1666
      %v1668 = vpop.f32.mrf.mxu0
      %1669 = vmatprep.mubr.bf16.mxu0 0
      %1670 = vmatmul.mubr.bf16.gmra.mxu0 %v1611
      %v1671 = vpop.f32.mrf.mxu0
      %v1672 = vadd.f32 0.0, %v1671
      %v1673 = vpop.f32.mrf.mxu0
      %v1674 = vpop.f32.mrf.mxu0
      %v1675 = vadd.f32 0.0, %v1674
      %v1676 = vpop.f32.mrf.mxu0
      %1677 = vdwg.mxu0
      %v1678 = vadd.f32 %v1556, %v1648
      %v1679 = vadd.f32 %v1557, %v1651
      %v1680 = vadd.f32 %v1558, %v1656
      %v1681 = vadd.f32 %v1559, %v1659
      %v1682 = vadd.f32 %v1560, %v1664
      %v1683 = vadd.f32 %v1561, %v1667
      %v1684 = vadd.f32 %v1562, %v1672
      %v1685 = vadd.f32 %v1563, %v1675
      %s1686 = scalar_lea.vmem %s1441, 9 [#allocation2]
      %v1687 = vld [vmem:[%s1686] ss:$2 sm:$0xff]
      %s1688 = scalar_lea.vmem %s1441, 73 [#allocation2]
      %v1689 = vld [vmem:[%s1688] ss:$2 sm:$0xff]
      %s1690 = scalar_lea.vmem %s1441, 137 [#allocation2]
      %v1691 = vld [vmem:[%s1690] ss:$2 sm:$0xff]
      %s1692 = scalar_lea.vmem %s1441, 201 [#allocation2]
      %v1693 = vld [vmem:[%s1692] ss:$2 sm:$0xff]
      %s1694 = scalar_lea.vmem %s1441, 265 [#allocation2]
      %v1695 = vld [vmem:[%s1694] ss:$2 sm:$0xff]
      %s1696 = scalar_lea.vmem %s1441, 329 [#allocation2]
      %v1697 = vld [vmem:[%s1696] ss:$2 sm:$0xff]
      %s1698 = scalar_lea.vmem %s1441, 393 [#allocation2]
      %v1699 = vld [vmem:[%s1698] ss:$2 sm:$0xff]
      %s1700 = scalar_lea.vmem %s1441, 457 [#allocation2]
      %v1701 = vld [vmem:[%s1700] ss:$2 sm:$0xff]
      %v1702 = vpack.c.bf16 %v1689, %v1687
      %v1703 = vpack.c.bf16 %v1693, %v1691
      %v1704 = vpack.c.bf16 %v1697, %v1695
      %v1705 = vpack.c.bf16 %v1701, %v1699
      %s1706 = scalar_lea.vmem %s3, 128
      %v1707 = vld [vmem:[%s1706] sm:$0xf]
      %v1708 = vld [vmem:[%s1706 + $0x4] sm:$0xf]
      %v1709 = vld [vmem:[%s1706 + $0x8] sm:$0xf]
      %v1710 = vld [vmem:[%s1706 + $0xc] sm:$0xf]
      %v1715 = vunpack.c.l.b16 %v1707
      %v1716 = vunpack.c.l.b16 %v1708
      %v1717 = vunpack.c.l.b16 %v1709
      %v1718 = vunpack.c.l.b16 %v1710
      %v1719 = vpack.c.b16 %v1716, %v1715
      %v1720 = vpack.c.b16 %v1718, %v1717
      %v1724 = vsel %vm619, %v1702, 0
      %v1727 = vsel %vm619, %v1703, 0
      %v1730 = vsel %vm619, %v1704, 0
      %v1733 = vsel %vm619, %v1705, 0
      %1735 = vmatprep.subr.bf16.mxu0 0
      %1736 = vmatpush1.bf16.msra.mxu0 0
      %1737 = vmatprep.subr.bf16.mxu0 0
      %1738 = vmatpush1.bf16.msra.mxu0 0
      %1739 = vmatprep.subr.bf16.mxu0 0
      %1740 = vmatpush1.bf16.msra.mxu0 0
      %1741 = vmatprep.subr.bf16.mxu0 0
      %1742 = vmatpush1.bf16.msra.mxu0 0
      %1743 = vmatprep.subr.bf16.mxu0 0
      %1744 = vmatpush1.bf16.msra.mxu0 0
      %1745 = vmatprep.subr.bf16.mxu0 0
      %1746 = vmatpush1.bf16.msra.mxu0 0
      %1747 = vmatprep.subr.bf16.mxu0 0
      %1748 = vmatpush1.bf16.msra.mxu0 %v1720
      %1749 = vmatprep.subr.bf16.mxu0 0
      %1750 = vmatpush1.bf16.msra.mxu0 %v1719
      %1751 = vmatprep.subr.bf16.mxu0 0
      %1752 = vmatpush2.bf16.msra.mxu0 0
      %1753 = vmatprep.subr.bf16.mxu0 0
      %1754 = vmatpush2.bf16.msra.mxu0 0
      %1755 = vmatprep.subr.bf16.mxu0 0
      %1756 = vmatpush2.bf16.msra.mxu0 0
      %1757 = vmatprep.subr.bf16.mxu0 0
      %1758 = vmatpush2.bf16.msra.mxu0 0
      %1759 = vmatprep.subr.bf16.mxu0 0
      %1760 = vmatpush2.bf16.msra.mxu0 0
      %1761 = vmatprep.subr.bf16.mxu0 0
      %1762 = vmatpush2.bf16.msra.mxu0 0
      %1763 = vmatprep.subr.bf16.mxu0 0
      %1764 = vmatpush2.bf16.msra.mxu0 0
      %1765 = vmatprep.subr.bf16.mxu0 0
      %1766 = vmatpush2.bf16.msra.mxu0 0
      %1767 = vmatprep.mubr.bf16.mxu0 0
      %1768 = vmatmul.mubr.bf16.gmra.mxu0 %v1724
      %v1769 = vpop.f32.mrf.mxu0
      %v1770 = vadd.f32 0.0, %v1769
      %v1771 = vpop.f32.mrf.mxu0
      %v1772 = vpop.f32.mrf.mxu0
      %v1773 = vadd.f32 0.0, %v1772
      %v1774 = vpop.f32.mrf.mxu0
      %1775 = vmatprep.mubr.bf16.mxu0 0
      %1776 = vmatmul.mubr.bf16.gmra.mxu0 %v1727
      %v1777 = vpop.f32.mrf.mxu0
      %v1778 = vadd.f32 0.0, %v1777
      %v1779 = vpop.f32.mrf.mxu0
      %v1780 = vpop.f32.mrf.mxu0
      %v1781 = vadd.f32 0.0, %v1780
      %v1782 = vpop.f32.mrf.mxu0
      %1783 = vmatprep.mubr.bf16.mxu0 0
      %1784 = vmatmul.mubr.bf16.gmra.mxu0 %v1730
      %v1785 = vpop.f32.mrf.mxu0
      %v1786 = vadd.f32 0.0, %v1785
      %v1787 = vpop.f32.mrf.mxu0
      %v1788 = vpop.f32.mrf.mxu0
      %v1789 = vadd.f32 0.0, %v1788
      %v1790 = vpop.f32.mrf.mxu0
      %1791 = vmatprep.mubr.bf16.mxu0 0
      %1792 = vmatmul.mubr.bf16.gmra.mxu0 %v1733
      %v1793 = vpop.f32.mrf.mxu0
      %v1794 = vadd.f32 0.0, %v1793
      %v1795 = vpop.f32.mrf.mxu0
      %v1796 = vpop.f32.mrf.mxu0
      %v1797 = vadd.f32 0.0, %v1796
      %v1798 = vpop.f32.mrf.mxu0
      %1799 = vdwg.mxu0
      %v1800 = vadd.f32 %v1678, %v1770
      %v1801 = vadd.f32 %v1679, %v1773
      %v1802 = vadd.f32 %v1680, %v1778
      %v1803 = vadd.f32 %v1681, %v1781
      %v1804 = vadd.f32 %v1682, %v1786
      %v1805 = vadd.f32 %v1683, %v1789
      %v1806 = vadd.f32 %v1684, %v1794
      %v1807 = vadd.f32 %v1685, %v1797
      %v1808 = vld [vmem:[%s4] sm:$0x1]
      %v1810 = vlaneseq
      %v1811 = vshrl.u32 %v1810, 7
      %v1812 = vsub.s32 0, %v1811
      %v1813 = vrot.slane %v1808, %v1812
      %v1815 = vadd.f32 %v1800, %v1813
      %v1816 = vadd.f32 %v1801, %v1813
      %v1817 = vadd.f32 %v1802, %v1813
      %v1818 = vadd.f32 %v1803, %v1813
      %v1819 = vadd.f32 %v1804, %v1813
      %v1820 = vadd.f32 %v1805, %v1813
      %v1821 = vadd.f32 %v1806, %v1813
      %v1822 = vadd.f32 %v1807, %v1813
      %v1823 = vmax.f32 %v1815, 0.0
      %v1824 = vmax.f32 %v1816, 0.0
      %v1825 = vmax.f32 %v1817, 0.0
      %v1826 = vmax.f32 %v1818, 0.0
      %v1827 = vmax.f32 %v1819, 0.0
      %v1828 = vmax.f32 %v1820, 0.0
      %v1829 = vmax.f32 %v1821, 0.0
      %v1830 = vmax.f32 %v1822, 0.0
      %1831 = vst [vmem:[%s224] sm:$0xff] %v1823
      %1832 = vst [vmem:[%s224 + $0x8] sm:$0xff] %v1824
      %1833 = vst [vmem:[%s224 + $0x10] sm:$0xff] %v1825
      %1834 = vst [vmem:[%s224 + $0x18] sm:$0xff] %v1826
      %1835 = vst [vmem:[%s224 + $0x20] sm:$0xff] %v1827
      %1836 = vst [vmem:[%s224 + $0x28] sm:$0xff] %v1828
      %1837 = vst [vmem:[%s224 + $0x30] sm:$0xff] %v1829
      %1838 = vst [vmem:[%s224 + $0x38] sm:$0xff] %v1830
      %p1839 = scmp.lt.s32.totalorder %s16, 1
      %s1840 = scalar_select %p1839, %s16, 1
      %s1841 = smul.addr %s1840, 8
      %s1842 = smul.addr %s1841, 8
      %s1843 = scalar_lea.vmem %s5, %s1842
      // Predicated region
      $region41: #{down_block.1} parent=39 // pred_check
        %p1844 = pneg %p144
      $region42: #{down_block.1} parent=39 // pred_check_branch
        %1846 = sbr.rel (%p1844) target = $region44
      $region43: #{down_block.1} parent=39 // pred_region
        _
      $region44: #{down_block.1} parent=39 // pred_fallthru
        _
    $region40: #{down_block.1} parent=5 // pred_fallthru
      _
    %p1847 = scmp.le.s32.totalorder 2, %s11
    // Predicated region
    $region45: #{down_block.1} parent=5 // pred_check
      %p1848 = pneg %p1847
    $region46: #{down_block.1} parent=5 // pred_check_branch
      %1850 = sbr.rel (%p1848) target = $region48
    $region47: #{down_block.1} parent=5 // pred_region
      %s1851 = ssub.s32 %s11, 2
      // Predicated region
      $region49: #{down_block.1} parent=47 // pred_check
        %p1852 = pneg %p150
      $region50: #{down_block.1} parent=47 // pred_check_branch
        %1854 = sbr.rel (%p1852) target = $region52
      $region51: #{down_block.1} parent=47 // pred_region
        %p1855 = scmp.lt.s32.totalorder %s17, 1
        %s1856 = scalar_select %p1855, %s17, 1
        %s1857 = smul.addr %s1856, 8
        %s1858 = smul.addr %s1857, 8
        %s1859 = scalar_lea.vmem %s5, %s1858
      $region52: #{down_block.1} parent=47 // pred_fallthru
        _
    $region48: #{down_block.1} parent=5 // pred_fallthru
      _
  $region6: #{down_block.1} parent=0 // loop_footer
    %s15 = sadd.s32 1, %s11
  $region7: #{down_block.1} parent=0 // loop_footer_branch
    %10 = sbr.rel target = $region3
  $region8: #{down_block.1} parent=0 // loop_exit
    _

</llo_original>
